<compile_context>
chip_gen: v6e
topology: v6e:2x2x1
jax: 0.10.0
libtpu: 0.0.40
codegen_flags: <defaults>
</compile_context>

<pallas_src>
import functools

import jax
import jax.numpy as jnp
from jax import lax
from jax.experimental import pallas as pl
from jax.experimental.pallas import tpu as pltpu


def _rnn_fused_kernel(xy_ref, h0_ref,
                      w1xy_ref, b1_ref, w1h_ref,
                      w2_ref, b2_ref, w3_ref, b3_ref, w4_ref, b4_ref,
                      out_ref, hid_ref,
                      zin_scr, *, T, B):
    """Single invocation; everything VMEM-resident.

        z_in  = [x;y] @ W1xy + b1                             (batched, T*B rows)
        h_t   = tanh(tanh(z_in[t] + h_{t-1} @ W1h) @ W2 + b2) (serial time loop)
        out   = relu(H_all @ W3 + b3) @ W4 + b4               (batched, T*B rows)
    """
    f32 = jnp.float32

    # ---- hoisted input projection: one big matmul over all timesteps -----
    zin_scr[...] = (jnp.dot(xy_ref[...], w1xy_ref[...],
                            preferred_element_type=f32) + b1_ref[...])

    # ---- serial recurrence: only W1h / W2 on the critical path ------------
    def step(t, h_prev):
        r = pl.multiple_of(t * B, B)                      # sublane-aligned row
        z = zin_scr[pl.ds(r, B), :] + jnp.dot(
            h_prev, w1h_ref[...], preferred_element_type=f32)
        h = jnp.tanh(jnp.dot(jnp.tanh(z), w2_ref[...],
                             preferred_element_type=f32) + b2_ref[...])
        hid_ref[pl.ds(r, B), :] = h
        return h

    lax.fori_loop(0, T, step, h0_ref[...], unroll=True)

    # ---- hoisted h2o path: two batched matmuls over all hidden states -----
    hids = hid_ref[...]
    o = jnp.maximum(jnp.dot(hids, w3_ref[...],
                            preferred_element_type=f32) + b3_ref[...], 0.0)
    out_ref[...] = (jnp.dot(o, w4_ref[...],
                            preferred_element_type=f32) + b4_ref[...])


@jax.jit
def rnn_forward_seq(xs, ys, h0, params):
    """Fused multi-timestep forward.

    xs: (T, B, dx)  ys: (T, B, dy)  h0: (B, H)   (all batch-major, f32)
    returns outs (T, B, O), hids (T, B, H);  hids[-1] is the final hidden.
    Per-timestep math is identical to RNN.forward().
    """
    w1xy, w1h, b1, w2, b2, w3, b3, w4, b4 = params
    T, B, dx = xs.shape
    dy = ys.shape[-1]
    H = w1h.shape[1]
    O = w4.shape[1]

    # Pre-concatenate x/y and fold time into the leading (sublane) dim so the
    # hoisted matmuls run at M = T*B and the kernel sees one flat slab.
    xy = jnp.concatenate([xs, ys], axis=-1).reshape(T * B, dx + dy)

    out_flat, hid_flat = pl.pallas_call(
        functools.partial(_rnn_fused_kernel, T=T, B=B),
        out_shape=(jax.ShapeDtypeStruct((T * B, O), jnp.float32),
                   jax.ShapeDtypeStruct((T * B, H), jnp.float32)),
        scratch_shapes=[pltpu.VMEM((T * B, H), jnp.float32)],
    )(xy, h0, w1xy, b1, w1h, w2, b2, w3, b3, w4, b4)

    return out_flat.reshape(T, B, O), hid_flat.reshape(T, B, H)


def rnn_forward(x, y, hidden, params):
    """PyTorch-parity single step (layout glue only, T == 1).

    x: (dx, B), y: (dy, B), hidden: (H, B) -> out (O, B), new_hidden (H, B),
    exactly like RNN.forward."""
    outs, hids = rnn_forward_seq(x.T[None], y.T[None], hidden.T, params)
    return outs[0].T, hids[0].T


def init_params(key, dx, dy, hidden_size, output_size):
    """PyTorch-Linear-style init (uniform(-1/sqrt(fan_in), +1/sqrt(fan_in))).
    Weights stored (in, out); W1 split into [x;y] and hidden row blocks so
    the kernel never materializes the concatenated input."""
    def linear(k, fan_in, fan_out):
        kw, kb = jax.random.split(k)
        bound = 1.0 / jnp.sqrt(jnp.float32(fan_in))
        w = jax.random.uniform(kw, (fan_in, fan_out), jnp.float32, -bound, bound)
        b = jax.random.uniform(kb, (1, fan_out), jnp.float32, -bound, bound)
        return w, b

    k1, k2, k3, k4 = jax.random.split(key, 4)
    w1, b1 = linear(k1, dx + dy + hidden_size, hidden_size)   # i2h[0]
    w2, b2 = linear(k2, hidden_size, hidden_size)             # i2h[2]
    w3, b3 = linear(k3, hidden_size, hidden_size)             # h2o[0]
    w4, b4 = linear(k4, hidden_size, output_size)             # h2o[2]
    w1xy, w1h = w1[:dx + dy], w1[dx + dy:]
    # TODO(synk): self.rnn (nn.RNN) and self.lstm (nn.LSTM) are never used in
    # forward(); their parameters are intentionally not materialized.
    return (w1xy, w1h, b1, w2, b2, w3, b3, w4, b4)


def init_hidden(hidden_size, batch_size):
    # Matches RNN.init_hidden: (hidden_size, batch_size) ones.
    return jnp.ones((hidden_size, batch_size), jnp.float32)


def _reference_seq(xs, ys, h0, params):
    """Pure-JAX reference: exact per-step transcription of RNN.forward
    (concatenated W1, batch-major)."""
    w1xy, w1h, b1, w2, b2, w3, b3, w4, b4 = params
    w1 = jnp.concatenate([w1xy, w1h], axis=0)

    def step(h, xy):
        x, y = xy
        c = jnp.concatenate([x, y, h], axis=1)          # (B, dx+dy+H)
        h_new = jnp.tanh(jnp.tanh(c @ w1 + b1) @ w2 + b2)
        out = jnp.maximum(h_new @ w3 + b3, 0.0) @ w4 + b4
        return h_new, (out, h_new)

    _, (outs, hids) = jax.lax.scan(step, h0, (xs, ys))
    return outs, hids


if __name__ == "__main__":
    dx, dy = 8, 8               # x-features + y-features = input_size = 16
    hidden_size = 32
    output_size = 16
    batch_size = 8
    T = 8                       # timesteps fused into one pallas_call

    key = jax.random.PRNGKey(0)
    kx, ky, kp = jax.random.split(key, 3)

    xs = jax.random.normal(kx, (T, batch_size, dx), jnp.float32)
    ys = jax.random.normal(ky, (T, batch_size, dy), jnp.float32)
    h0 = init_hidden(hidden_size, batch_size)          # (H, B), PyTorch layout
    h0_bm = h0.T                                        # batch-major for kernel

    params = init_params(kp, dx, dy, hidden_size, output_size)

    # Fused multi-timestep path (single pallas_call, in-kernel recurrence).
    outs, hids = rnn_forward_seq(xs, ys, h0_bm, params)
    jax.block_until_ready((outs, hids))

    ref_outs, ref_hids = _reference_seq(xs, ys, h0_bm, params)
    assert outs.shape == (T, batch_size, output_size)
    assert hids.shape == (T, batch_size, hidden_size)
    assert jnp.allclose(outs, ref_outs, atol=1e-4, rtol=1e-4)
    assert jnp.allclose(hids, ref_hids, atol=1e-4, rtol=1e-4)

    # PyTorch-parity single-step interface (shapes (O,B), (H,B)).
    out0, hid0 = rnn_forward(xs[0].T, ys[0].T, h0, params)
    jax.block_until_ready((out0, hid0))
    assert out0.shape == (output_size, batch_size)
    assert hid0.shape == (hidden_size, batch_size)
    assert jnp.allclose(out0, ref_outs[0].T, atol=1e-4, rtol=1e-4)
    assert jnp.allclose(hid0, ref_hids[0].T, atol=1e-4, rtol=1e-4)

    print("KERNEL_OK")
</pallas_src>

<mosaic_0001>
module attributes {stable_mosaic.version = 11 : i64} {
  func.func @_rnn_fused_kernel(%arg0: memref<64x16xf32, #tpu.memory_space<vmem>>, %arg1: memref<8x32xf32, #tpu.memory_space<vmem>>, %arg2: memref<16x32xf32, #tpu.memory_space<vmem>>, %arg3: memref<1x32xf32, #tpu.memory_space<vmem>>, %arg4: memref<32x32xf32, #tpu.memory_space<vmem>>, %arg5: memref<32x32xf32, #tpu.memory_space<vmem>>, %arg6: memref<1x32xf32, #tpu.memory_space<vmem>>, %arg7: memref<32x32xf32, #tpu.memory_space<vmem>>, %arg8: memref<1x32xf32, #tpu.memory_space<vmem>>, %arg9: memref<32x16xf32, #tpu.memory_space<vmem>>, %arg10: memref<1x16xf32, #tpu.memory_space<vmem>>, %arg11: memref<64x16xf32, #tpu.memory_space<vmem>>, %arg12: memref<64x32xf32, #tpu.memory_space<vmem>>, %arg13: memref<64x32xf32, #tpu.memory_space<vmem>>) attributes {dimension_semantics = [], scalar_prefetch = 0 : i64, scratch_operands = 1 : i64, tpu.core_type = #tpu.core_type<tc>} {
    %c0 = arith.constant 0 : index
    %c0_0 = arith.constant 0 : index
    %0 = vector.load %arg0[%c0, %c0_0] : memref<64x16xf32, #tpu.memory_space<vmem>>, vector<64x16xf32>
    %c0_1 = arith.constant 0 : index
    %c0_2 = arith.constant 0 : index
    %1 = vector.load %arg2[%c0_1, %c0_2] : memref<16x32xf32, #tpu.memory_space<vmem>>, vector<16x32xf32>
    %cst = arith.constant dense<0.000000e+00> : vector<64x32xf32>
    %2 = tpu.matmul %0, %1, %cst {dimension_numbers = #tpu.dot_dimension_numbers<[1], [0], [0], [1], [0, 0, 1, 1], [], []>} : vector<64x16xf32>, vector<16x32xf32>, vector<64x32xf32> -> vector<64x32xf32>
    %c0_3 = arith.constant 0 : index
    %c0_4 = arith.constant 0 : index
    %3 = vector.load %arg3[%c0_3, %c0_4] : memref<1x32xf32, #tpu.memory_space<vmem>>, vector<1x32xf32>
    %4 = vector.broadcast %3 : vector<1x32xf32> to vector<64x32xf32>
    %5 = arith.addf %2, %4 : vector<64x32xf32>
    %c0_5 = arith.constant 0 : index
    %c0_6 = arith.constant 0 : index
    %6 = vector.load %arg13[%c0_5, %c0_6] : memref<64x32xf32, #tpu.memory_space<vmem>>, vector<64x32xf32>
    tpu.vector_store %arg13[%c0_5, %c0_6], %5 {strides = array<i32>} : memref<64x32xf32, #tpu.memory_space<vmem>>, vector<64x32xf32>,
    %c0_7 = arith.constant 0 : index
    %c0_8 = arith.constant 0 : index
    %7 = vector.load %arg1[%c0_7, %c0_8] : memref<8x32xf32, #tpu.memory_space<vmem>>, vector<8x32xf32>
    %c0_i32 = arith.constant 0 : i32
    %c8_i32 = arith.constant 8 : i32
    %8 = arith.muli %c0_i32, %c8_i32 : i32
    %9 = tpu.assume_multiple %8, 8 : i32
    %10 = arith.index_cast %9 : i32 to index
    %c0_9 = arith.constant 0 : index
    %11 = vector.load %arg13[%10, %c0_9] : memref<64x32xf32, #tpu.memory_space<vmem>>, vector<8x32xf32>
    %c0_10 = arith.constant 0 : index
    %c0_11 = arith.constant 0 : index
    %12 = vector.load %arg4[%c0_10, %c0_11] : memref<32x32xf32, #tpu.memory_space<vmem>>, vector<32x32xf32>
    %cst_12 = arith.constant dense<0.000000e+00> : vector<8x32xf32>
    %13 = tpu.matmul %7, %12, %cst_12 {dimension_numbers = #tpu.dot_dimension_numbers<[1], [0], [0], [1], [0, 0, 1, 1], [], []>} : vector<8x32xf32>, vector<32x32xf32>, vector<8x32xf32> -> vector<8x32xf32>
    %14 = arith.addf %11, %13 : vector<8x32xf32>
    %15 = math.tanh %14 : vector<8x32xf32>
    %c0_13 = arith.constant 0 : index
    %c0_14 = arith.constant 0 : index
    %16 = vector.load %arg5[%c0_13, %c0_14] : memref<32x32xf32, #tpu.memory_space<vmem>>, vector<32x32xf32>
    %cst_15 = arith.constant dense<0.000000e+00> : vector<8x32xf32>
    %17 = tpu.matmul %15, %16, %cst_15 {dimension_numbers = #tpu.dot_dimension_numbers<[1], [0], [0], [1], [0, 0, 1, 1], [], []>} : vector<8x32xf32>, vector<32x32xf32>, vector<8x32xf32> -> vector<8x32xf32>
    %c0_16 = arith.constant 0 : index
    %c0_17 = arith.constant 0 : index
    %18 = vector.load %arg6[%c0_16, %c0_17] : memref<1x32xf32, #tpu.memory_space<vmem>>, vector<1x32xf32>
    %19 = vector.broadcast %18 : vector<1x32xf32> to vector<8x32xf32>
    %20 = arith.addf %17, %19 : vector<8x32xf32>
    %21 = math.tanh %20 : vector<8x32xf32>
    %22 = arith.index_cast %9 : i32 to index
    %c0_18 = arith.constant 0 : index
    %23 = vector.load %arg12[%22, %c0_18] : memref<64x32xf32, #tpu.memory_space<vmem>>, vector<8x32xf32>
    tpu.vector_store %arg12[%22, %c0_18], %21 {strides = array<i32>} : memref<64x32xf32, #tpu.memory_space<vmem>>, vector<8x32xf32>,
    %c1_i32 = arith.constant 1 : i32
    %c8_i32_19 = arith.constant 8 : i32
    %24 = arith.muli %c1_i32, %c8_i32_19 : i32
    %25 = tpu.assume_multiple %24, 8 : i32
    %26 = arith.index_cast %25 : i32 to index
    %c0_20 = arith.constant 0 : index
    %27 = vector.load %arg13[%26, %c0_20] : memref<64x32xf32, #tpu.memory_space<vmem>>, vector<8x32xf32>
    %c0_21 = arith.constant 0 : index
    %c0_22 = arith.constant 0 : index
    %28 = vector.load %arg4[%c0_21, %c0_22] : memref<32x32xf32, #tpu.memory_space<vmem>>, vector<32x32xf32>
    %cst_23 = arith.constant dense<0.000000e+00> : vector<8x32xf32>
    %29 = tpu.matmul %21, %28, %cst_23 {dimension_numbers = #tpu.dot_dimension_numbers<[1], [0], [0], [1], [0, 0, 1, 1], [], []>} : vector<8x32xf32>, vector<32x32xf32>, vector<8x32xf32> -> vector<8x32xf32>
    %30 = arith.addf %27, %29 : vector<8x32xf32>
    %31 = math.tanh %30 : vector<8x32xf32>
    %c0_24 = arith.constant 0 : index
    %c0_25 = arith.constant 0 : index
    %32 = vector.load %arg5[%c0_24, %c0_25] : memref<32x32xf32, #tpu.memory_space<vmem>>, vector<32x32xf32>
    %cst_26 = arith.constant dense<0.000000e+00> : vector<8x32xf32>
    %33 = tpu.matmul %31, %32, %cst_26 {dimension_numbers = #tpu.dot_dimension_numbers<[1], [0], [0], [1], [0, 0, 1, 1], [], []>} : vector<8x32xf32>, vector<32x32xf32>, vector<8x32xf32> -> vector<8x32xf32>
    %c0_27 = arith.constant 0 : index
    %c0_28 = arith.constant 0 : index
    %34 = vector.load %arg6[%c0_27, %c0_28] : memref<1x32xf32, #tpu.memory_space<vmem>>, vector<1x32xf32>
    %35 = vector.broadcast %34 : vector<1x32xf32> to vector<8x32xf32>
    %36 = arith.addf %33, %35 : vector<8x32xf32>
    %37 = math.tanh %36 : vector<8x32xf32>
    %38 = arith.index_cast %25 : i32 to index
    %c0_29 = arith.constant 0 : index
    %39 = vector.load %arg12[%38, %c0_29] : memref<64x32xf32, #tpu.memory_space<vmem>>, vector<8x32xf32>
    tpu.vector_store %arg12[%38, %c0_29], %37 {strides = array<i32>} : memref<64x32xf32, #tpu.memory_space<vmem>>, vector<8x32xf32>,
    %c2_i32 = arith.constant 2 : i32
    %c8_i32_30 = arith.constant 8 : i32
    %40 = arith.muli %c2_i32, %c8_i32_30 : i32
    %41 = tpu.assume_multiple %40, 8 : i32
    %42 = arith.index_cast %41 : i32 to index
    %c0_31 = arith.constant 0 : index
    %43 = vector.load %arg13[%42, %c0_31] : memref<64x32xf32, #tpu.memory_space<vmem>>, vector<8x32xf32>
    %c0_32 = arith.constant 0 : index
    %c0_33 = arith.constant 0 : index
    %44 = vector.load %arg4[%c0_32, %c0_33] : memref<32x32xf32, #tpu.memory_space<vmem>>, vector<32x32xf32>
    %cst_34 = arith.constant dense<0.000000e+00> : vector<8x32xf32>
    %45 = tpu.matmul %37, %44, %cst_34 {dimension_numbers = #tpu.dot_dimension_numbers<[1], [0], [0], [1], [0, 0, 1, 1], [], []>} : vector<8x32xf32>, vector<32x32xf32>, vector<8x32xf32> -> vector<8x32xf32>
    %46 = arith.addf %43, %45 : vector<8x32xf32>
    %47 = math.tanh %46 : vector<8x32xf32>
    %c0_35 = arith.constant 0 : index
    %c0_36 = arith.constant 0 : index
    %48 = vector.load %arg5[%c0_35, %c0_36] : memref<32x32xf32, #tpu.memory_space<vmem>>, vector<32x32xf32>
    %cst_37 = arith.constant dense<0.000000e+00> : vector<8x32xf32>
    %49 = tpu.matmul %47, %48, %cst_37 {dimension_numbers = #tpu.dot_dimension_numbers<[1], [0], [0], [1], [0, 0, 1, 1], [], []>} : vector<8x32xf32>, vector<32x32xf32>, vector<8x32xf32> -> vector<8x32xf32>
    %c0_38 = arith.constant 0 : index
    %c0_39 = arith.constant 0 : index
    %50 = vector.load %arg6[%c0_38, %c0_39] : memref<1x32xf32, #tpu.memory_space<vmem>>, vector<1x32xf32>
    %51 = vector.broadcast %50 : vector<1x32xf32> to vector<8x32xf32>
    %52 = arith.addf %49, %51 : vector<8x32xf32>
    %53 = math.tanh %52 : vector<8x32xf32>
    %54 = arith.index_cast %41 : i32 to index
    %c0_40 = arith.constant 0 : index
    %55 = vector.load %arg12[%54, %c0_40] : memref<64x32xf32, #tpu.memory_space<vmem>>, vector<8x32xf32>
    tpu.vector_store %arg12[%54, %c0_40], %53 {strides = array<i32>} : memref<64x32xf32, #tpu.memory_space<vmem>>, vector<8x32xf32>,
    %c3_i32 = arith.constant 3 : i32
    %c8_i32_41 = arith.constant 8 : i32
    %56 = arith.muli %c3_i32, %c8_i32_41 : i32
    %57 = tpu.assume_multiple %56, 8 : i32
    %58 = arith.index_cast %57 : i32 to index
    %c0_42 = arith.constant 0 : index
    %59 = vector.load %arg13[%58, %c0_42] : memref<64x32xf32, #tpu.memory_space<vmem>>, vector<8x32xf32>
    %c0_43 = arith.constant 0 : index
    %c0_44 = arith.constant 0 : index
    %60 = vector.load %arg4[%c0_43, %c0_44] : memref<32x32xf32, #tpu.memory_space<vmem>>, vector<32x32xf32>
    %cst_45 = arith.constant dense<0.000000e+00> : vector<8x32xf32>
    %61 = tpu.matmul %53, %60, %cst_45 {dimension_numbers = #tpu.dot_dimension_numbers<[1], [0], [0], [1], [0, 0, 1, 1], [], []>} : vector<8x32xf32>, vector<32x32xf32>, vector<8x32xf32> -> vector<8x32xf32>
    %62 = arith.addf %59, %61 : vector<8x32xf32>
    %63 = math.tanh %62 : vector<8x32xf32>
    %c0_46 = arith.constant 0 : index
    %c0_47 = arith.constant 0 : index
    %64 = vector.load %arg5[%c0_46, %c0_47] : memref<32x32xf32, #tpu.memory_space<vmem>>, vector<32x32xf32>
    %cst_48 = arith.constant dense<0.000000e+00> : vector<8x32xf32>
    %65 = tpu.matmul %63, %64, %cst_48 {dimension_numbers = #tpu.dot_dimension_numbers<[1], [0], [0], [1], [0, 0, 1, 1], [], []>} : vector<8x32xf32>, vector<32x32xf32>, vector<8x32xf32> -> vector<8x32xf32>
    %c0_49 = arith.constant 0 : index
    %c0_50 = arith.constant 0 : index
    %66 = vector.load %arg6[%c0_49, %c0_50] : memref<1x32xf32, #tpu.memory_space<vmem>>, vector<1x32xf32>
    %67 = vector.broadcast %66 : vector<1x32xf32> to vector<8x32xf32>
    %68 = arith.addf %65, %67 : vector<8x32xf32>
    %69 = math.tanh %68 : vector<8x32xf32>
    %70 = arith.index_cast %57 : i32 to index
    %c0_51 = arith.constant 0 : index
    %71 = vector.load %arg12[%70, %c0_51] : memref<64x32xf32, #tpu.memory_space<vmem>>, vector<8x32xf32>
    tpu.vector_store %arg12[%70, %c0_51], %69 {strides = array<i32>} : memref<64x32xf32, #tpu.memory_space<vmem>>, vector<8x32xf32>,
    %c4_i32 = arith.constant 4 : i32
    %c8_i32_52 = arith.constant 8 : i32
    %72 = arith.muli %c4_i32, %c8_i32_52 : i32
    %73 = tpu.assume_multiple %72, 8 : i32
    %74 = arith.index_cast %73 : i32 to index
    %c0_53 = arith.constant 0 : index
    %75 = vector.load %arg13[%74, %c0_53] : memref<64x32xf32, #tpu.memory_space<vmem>>, vector<8x32xf32>
    %c0_54 = arith.constant 0 : index
    %c0_55 = arith.constant 0 : index
    %76 = vector.load %arg4[%c0_54, %c0_55] : memref<32x32xf32, #tpu.memory_space<vmem>>, vector<32x32xf32>
    %cst_56 = arith.constant dense<0.000000e+00> : vector<8x32xf32>
    %77 = tpu.matmul %69, %76, %cst_56 {dimension_numbers = #tpu.dot_dimension_numbers<[1], [0], [0], [1], [0, 0, 1, 1], [], []>} : vector<8x32xf32>, vector<32x32xf32>, vector<8x32xf32> -> vector<8x32xf32>
    %78 = arith.addf %75, %77 : vector<8x32xf32>
    %79 = math.tanh %78 : vector<8x32xf32>
    %c0_57 = arith.constant 0 : index
    %c0_58 = arith.constant 0 : index
    %80 = vector.load %arg5[%c0_57, %c0_58] : memref<32x32xf32, #tpu.memory_space<vmem>>, vector<32x32xf32>
    %cst_59 = arith.constant dense<0.000000e+00> : vector<8x32xf32>
    %81 = tpu.matmul %79, %80, %cst_59 {dimension_numbers = #tpu.dot_dimension_numbers<[1], [0], [0], [1], [0, 0, 1, 1], [], []>} : vector<8x32xf32>, vector<32x32xf32>, vector<8x32xf32> -> vector<8x32xf32>
    %c0_60 = arith.constant 0 : index
    %c0_61 = arith.constant 0 : index
    %82 = vector.load %arg6[%c0_60, %c0_61] : memref<1x32xf32, #tpu.memory_space<vmem>>, vector<1x32xf32>
    %83 = vector.broadcast %82 : vector<1x32xf32> to vector<8x32xf32>
    %84 = arith.addf %81, %83 : vector<8x32xf32>
    %85 = math.tanh %84 : vector<8x32xf32>
    %86 = arith.index_cast %73 : i32 to index
    %c0_62 = arith.constant 0 : index
    %87 = vector.load %arg12[%86, %c0_62] : memref<64x32xf32, #tpu.memory_space<vmem>>, vector<8x32xf32>
    tpu.vector_store %arg12[%86, %c0_62], %85 {strides = array<i32>} : memref<64x32xf32, #tpu.memory_space<vmem>>, vector<8x32xf32>,
    %c5_i32 = arith.constant 5 : i32
    %c8_i32_63 = arith.constant 8 : i32
    %88 = arith.muli %c5_i32, %c8_i32_63 : i32
    %89 = tpu.assume_multiple %88, 8 : i32
    %90 = arith.index_cast %89 : i32 to index
    %c0_64 = arith.constant 0 : index
    %91 = vector.load %arg13[%90, %c0_64] : memref<64x32xf32, #tpu.memory_space<vmem>>, vector<8x32xf32>
    %c0_65 = arith.constant 0 : index
    %c0_66 = arith.constant 0 : index
    %92 = vector.load %arg4[%c0_65, %c0_66] : memref<32x32xf32, #tpu.memory_space<vmem>>, vector<32x32xf32>
    %cst_67 = arith.constant dense<0.000000e+00> : vector<8x32xf32>
    %93 = tpu.matmul %85, %92, %cst_67 {dimension_numbers = #tpu.dot_dimension_numbers<[1], [0], [0], [1], [0, 0, 1, 1], [], []>} : vector<8x32xf32>, vector<32x32xf32>, vector<8x32xf32> -> vector<8x32xf32>
    %94 = arith.addf %91, %93 : vector<8x32xf32>
    %95 = math.tanh %94 : vector<8x32xf32>
    %c0_68 = arith.constant 0 : index
    %c0_69 = arith.constant 0 : index
    %96 = vector.load %arg5[%c0_68, %c0_69] : memref<32x32xf32, #tpu.memory_space<vmem>>, vector<32x32xf32>
    %cst_70 = arith.constant dense<0.000000e+00> : vector<8x32xf32>
    %97 = tpu.matmul %95, %96, %cst_70 {dimension_numbers = #tpu.dot_dimension_numbers<[1], [0], [0], [1], [0, 0, 1, 1], [], []>} : vector<8x32xf32>, vector<32x32xf32>, vector<8x32xf32> -> vector<8x32xf32>
    %c0_71 = arith.constant 0 : index
    %c0_72 = arith.constant 0 : index
    %98 = vector.load %arg6[%c0_71, %c0_72] : memref<1x32xf32, #tpu.memory_space<vmem>>, vector<1x32xf32>
    %99 = vector.broadcast %98 : vector<1x32xf32> to vector<8x32xf32>
    %100 = arith.addf %97, %99 : vector<8x32xf32>
    %101 = math.tanh %100 : vector<8x32xf32>
    %102 = arith.index_cast %89 : i32 to index
    %c0_73 = arith.constant 0 : index
    %103 = vector.load %arg12[%102, %c0_73] : memref<64x32xf32, #tpu.memory_space<vmem>>, vector<8x32xf32>
    tpu.vector_store %arg12[%102, %c0_73], %101 {strides = array<i32>} : memref<64x32xf32, #tpu.memory_space<vmem>>, vector<8x32xf32>,
    %c6_i32 = arith.constant 6 : i32
    %c8_i32_74 = arith.constant 8 : i32
    %104 = arith.muli %c6_i32, %c8_i32_74 : i32
    %105 = tpu.assume_multiple %104, 8 : i32
    %106 = arith.index_cast %105 : i32 to index
    %c0_75 = arith.constant 0 : index
    %107 = vector.load %arg13[%106, %c0_75] : memref<64x32xf32, #tpu.memory_space<vmem>>, vector<8x32xf32>
    %c0_76 = arith.constant 0 : index
    %c0_77 = arith.constant 0 : index
    %108 = vector.load %arg4[%c0_76, %c0_77] : memref<32x32xf32, #tpu.memory_space<vmem>>, vector<32x32xf32>
    %cst_78 = arith.constant dense<0.000000e+00> : vector<8x32xf32>
    %109 = tpu.matmul %101, %108, %cst_78 {dimension_numbers = #tpu.dot_dimension_numbers<[1], [0], [0], [1], [0, 0, 1, 1], [], []>} : vector<8x32xf32>, vector<32x32xf32>, vector<8x32xf32> -> vector<8x32xf32>
    %110 = arith.addf %107, %109 : vector<8x32xf32>
    %111 = math.tanh %110 : vector<8x32xf32>
    %c0_79 = arith.constant 0 : index
    %c0_80 = arith.constant 0 : index
    %112 = vector.load %arg5[%c0_79, %c0_80] : memref<32x32xf32, #tpu.memory_space<vmem>>, vector<32x32xf32>
    %cst_81 = arith.constant dense<0.000000e+00> : vector<8x32xf32>
    %113 = tpu.matmul %111, %112, %cst_81 {dimension_numbers = #tpu.dot_dimension_numbers<[1], [0], [0], [1], [0, 0, 1, 1], [], []>} : vector<8x32xf32>, vector<32x32xf32>, vector<8x32xf32> -> vector<8x32xf32>
    %c0_82 = arith.constant 0 : index
    %c0_83 = arith.constant 0 : index
    %114 = vector.load %arg6[%c0_82, %c0_83] : memref<1x32xf32, #tpu.memory_space<vmem>>, vector<1x32xf32>
    %115 = vector.broadcast %114 : vector<1x32xf32> to vector<8x32xf32>
    %116 = arith.addf %113, %115 : vector<8x32xf32>
    %117 = math.tanh %116 : vector<8x32xf32>
    %118 = arith.index_cast %105 : i32 to index
    %c0_84 = arith.constant 0 : index
    %119 = vector.load %arg12[%118, %c0_84] : memref<64x32xf32, #tpu.memory_space<vmem>>, vector<8x32xf32>
    tpu.vector_store %arg12[%118, %c0_84], %117 {strides = array<i32>} : memref<64x32xf32, #tpu.memory_space<vmem>>, vector<8x32xf32>,
    %c7_i32 = arith.constant 7 : i32
    %c8_i32_85 = arith.constant 8 : i32
    %120 = arith.muli %c7_i32, %c8_i32_85 : i32
    %121 = tpu.assume_multiple %120, 8 : i32
    %122 = arith.index_cast %121 : i32 to index
    %c0_86 = arith.constant 0 : index
    %123 = vector.load %arg13[%122, %c0_86] : memref<64x32xf32, #tpu.memory_space<vmem>>, vector<8x32xf32>
    %c0_87 = arith.constant 0 : index
    %c0_88 = arith.constant 0 : index
    %124 = vector.load %arg4[%c0_87, %c0_88] : memref<32x32xf32, #tpu.memory_space<vmem>>, vector<32x32xf32>
    %cst_89 = arith.constant dense<0.000000e+00> : vector<8x32xf32>
    %125 = tpu.matmul %117, %124, %cst_89 {dimension_numbers = #tpu.dot_dimension_numbers<[1], [0], [0], [1], [0, 0, 1, 1], [], []>} : vector<8x32xf32>, vector<32x32xf32>, vector<8x32xf32> -> vector<8x32xf32>
    %126 = arith.addf %123, %125 : vector<8x32xf32>
    %127 = math.tanh %126 : vector<8x32xf32>
    %c0_90 = arith.constant 0 : index
    %c0_91 = arith.constant 0 : index
    %128 = vector.load %arg5[%c0_90, %c0_91] : memref<32x32xf32, #tpu.memory_space<vmem>>, vector<32x32xf32>
    %cst_92 = arith.constant dense<0.000000e+00> : vector<8x32xf32>
    %129 = tpu.matmul %127, %128, %cst_92 {dimension_numbers = #tpu.dot_dimension_numbers<[1], [0], [0], [1], [0, 0, 1, 1], [], []>} : vector<8x32xf32>, vector<32x32xf32>, vector<8x32xf32> -> vector<8x32xf32>
    %c0_93 = arith.constant 0 : index
    %c0_94 = arith.constant 0 : index
    %130 = vector.load %arg6[%c0_93, %c0_94] : memref<1x32xf32, #tpu.memory_space<vmem>>, vector<1x32xf32>
    %131 = vector.broadcast %130 : vector<1x32xf32> to vector<8x32xf32>
    %132 = arith.addf %129, %131 : vector<8x32xf32>
    %133 = math.tanh %132 : vector<8x32xf32>
    %134 = arith.index_cast %121 : i32 to index
    %c0_95 = arith.constant 0 : index
    %135 = vector.load %arg12[%134, %c0_95] : memref<64x32xf32, #tpu.memory_space<vmem>>, vector<8x32xf32>
    tpu.vector_store %arg12[%134, %c0_95], %133 {strides = array<i32>} : memref<64x32xf32, #tpu.memory_space<vmem>>, vector<8x32xf32>,
    %c8_i32_96 = arith.constant 8 : i32
    %c0_97 = arith.constant 0 : index
    %c0_98 = arith.constant 0 : index
    %136 = vector.load %arg12[%c0_97, %c0_98] : memref<64x32xf32, #tpu.memory_space<vmem>>, vector<64x32xf32>
    %c0_99 = arith.constant 0 : index
    %c0_100 = arith.constant 0 : index
    %137 = vector.load %arg7[%c0_99, %c0_100] : memref<32x32xf32, #tpu.memory_space<vmem>>, vector<32x32xf32>
    %cst_101 = arith.constant dense<0.000000e+00> : vector<64x32xf32>
    %138 = tpu.matmul %136, %137, %cst_101 {dimension_numbers = #tpu.dot_dimension_numbers<[1], [0], [0], [1], [0, 0, 1, 1], [], []>} : vector<64x32xf32>, vector<32x32xf32>, vector<64x32xf32> -> vector<64x32xf32>
    %c0_102 = arith.constant 0 : index
    %c0_103 = arith.constant 0 : index
    %139 = vector.load %arg8[%c0_102, %c0_103] : memref<1x32xf32, #tpu.memory_space<vmem>>, vector<1x32xf32>
    %140 = vector.broadcast %139 : vector<1x32xf32> to vector<64x32xf32>
    %141 = arith.addf %138, %140 : vector<64x32xf32>
    %cst_104 = arith.constant 0.000000e+00 : f32
    %142 = vector.broadcast %cst_104 : f32 to vector<64x32xf32>
    %143 = arith.maximumf %141, %142 : vector<64x32xf32>
    %c0_105 = arith.constant 0 : index
    %c0_106 = arith.constant 0 : index
    %144 = vector.load %arg9[%c0_105, %c0_106] : memref<32x16xf32, #tpu.memory_space<vmem>>, vector<32x16xf32>
    %cst_107 = arith.constant dense<0.000000e+00> : vector<64x16xf32>
    %145 = tpu.matmul %143, %144, %cst_107 {dimension_numbers = #tpu.dot_dimension_numbers<[1], [0], [0], [1], [0, 0, 1, 1], [], []>} : vector<64x32xf32>, vector<32x16xf32>, vector<64x16xf32> -> vector<64x16xf32>
    %c0_108 = arith.constant 0 : index
    %c0_109 = arith.constant 0 : index
    %146 = vector.load %arg10[%c0_108, %c0_109] : memref<1x16xf32, #tpu.memory_space<vmem>>, vector<1x16xf32>
    %147 = vector.broadcast %146 : vector<1x16xf32> to vector<64x16xf32>
    %148 = arith.addf %145, %147 : vector<64x16xf32>
    %c0_110 = arith.constant 0 : index
    %c0_111 = arith.constant 0 : index
    %149 = vector.load %arg11[%c0_110, %c0_111] : memref<64x16xf32, #tpu.memory_space<vmem>>, vector<64x16xf32>
    tpu.vector_store %arg11[%c0_110, %c0_111], %148 {strides = array<i32>} : memref<64x16xf32, #tpu.memory_space<vmem>>, vector<64x16xf32>,
    return
  }
}

</mosaic_0001>

<llo_original>
// kernel: rnn_forward_seq.1
$region0: #{rnn_forward_seq.1}
  #allocation0 [shape = 'u32[]', space=smem, size = 0x4, offset = 0x4, fixed_abs, tag = 'smem constant byte address 0x4 - core index']
  #allocation1 [shape = 'u32[144,128]{1,0:T(1,128)}', space=vmem, size = 0x12000, scoped, tag = 'internal scratch']
  #allocation2 [shape = 'f32[64,32]{1,0:T(8,128)}', space=vmem, size = 0x8000, scoped, tag = 'scratch operand']
  %s0 = inlined_call_operand.vmem [shape: f32[64,16], index: 0, kind: input, shape index: {}]
  %s1 = inlined_call_operand.vmem [shape: f32[8,32], index: 1, kind: input, shape index: {}]
  %s2 = inlined_call_operand.vmem [shape: f32[16,32], index: 2, kind: input, shape index: {}]
  %s3 = inlined_call_operand.vmem [shape: f32[1,32], index: 3, kind: input, shape index: {}]
  %s4 = inlined_call_operand.vmem [shape: f32[32,32], index: 4, kind: input, shape index: {}]
  %s5 = inlined_call_operand.vmem [shape: f32[32,32], index: 5, kind: input, shape index: {}]
  %s6 = inlined_call_operand.vmem [shape: f32[1,32], index: 6, kind: input, shape index: {}]
  %s7 = inlined_call_operand.vmem [shape: f32[32,32], index: 7, kind: input, shape index: {}]
  %s8 = inlined_call_operand.vmem [shape: f32[1,32], index: 8, kind: input, shape index: {}]
  %s9 = inlined_call_operand.vmem [shape: f32[32,16], index: 9, kind: input, shape index: {}]
  %s10 = inlined_call_operand.vmem [shape: f32[1,16], index: 10, kind: input, shape index: {}]
  %s11 = inlined_call_operand.hbm [shape: f32[64,16], index: 11, kind: output, shape index: {0}]
  %s12 = inlined_call_operand.hbm [shape: f32[64,32], index: 12, kind: output, shape index: {1}]
  %13 = xla_tuple %s11, %s12
  %s14 = sld [smem:[#allocation0]]
  $region62: #{rnn_forward_seq.1} parent=0
    _
  %s16 = ssub.s32 1, %s14
  %s17 = scalar_select 0, %s16, %s14
  $region1: #{rnn_forward_seq.1} parent=0
    #allocation3 [shape = 'u8[32768]{0}', space=vmem, size = 0x8000, scoped, tag = 'output window, operand 0, single buffered']
    #allocation4 [shape = 's32[1]{0}', space=sflag, size = 0x4, scoped, tag = 'scoped memory for rnn_forward_seq.1']
    #allocation5 [shape = 'u8[32768]{0}', space=vmem, size = 0x8000, scoped, tag = 'output window, operand 1, single buffered']
    #allocation6 [shape = 's32[1]{0}', space=sflag, size = 0x4, scoped, tag = 'scoped memory for rnn_forward_seq.1']
    %18 = vsyncpa [#allocation4], 0
    %19 = vsyncpa [#allocation6], 0
    // Predicated region
    $region2: #{rnn_forward_seq.1} parent=1 // pred_check
      _
    $region3: #{rnn_forward_seq.1} parent=1 // pred_check_branch
      %21 = sbr.rel (0) target = $region5
    $region4: #{rnn_forward_seq.1} parent=1 // pred_region
      _
    $region5: #{rnn_forward_seq.1} parent=1 // pred_fallthru
      _
    // Predicated region
    $region6: #{rnn_forward_seq.1} parent=1 // pred_check
      _
    $region7: #{rnn_forward_seq.1} parent=1 // pred_check_branch
      %23 = sbr.rel (0) target = $region9
    $region8: #{rnn_forward_seq.1} parent=1 // pred_region
      _
    $region9: #{rnn_forward_seq.1} parent=1 // pred_fallthru
      _
    // Predicated region
    $region10: #{rnn_forward_seq.1} parent=1 // pred_check
      _
    $region11: #{rnn_forward_seq.1} parent=1 // pred_check_branch
      %25 = sbr.rel (0) target = $region13
    $region12: #{rnn_forward_seq.1} parent=1 // pred_region
      _
    $region13: #{rnn_forward_seq.1} parent=1 // pred_fallthru
      _
    // Predicated region
    $region14: #{rnn_forward_seq.1} parent=1 // pred_check
      _
    $region15: #{rnn_forward_seq.1} parent=1 // pred_check_branch
      %27 = sbr.rel (0) target = $region17
    $region16: #{rnn_forward_seq.1} parent=1 // pred_region
      _
    $region17: #{rnn_forward_seq.1} parent=1 // pred_fallthru
      _
    // Predicated region
    $region18: #{rnn_forward_seq.1} parent=1 // pred_check
      _
    $region19: #{rnn_forward_seq.1} parent=1 // pred_check_branch
      %29 = sbr.rel (0) target = $region21
    $region20: #{rnn_forward_seq.1} parent=1 // pred_region
      _
    $region21: #{rnn_forward_seq.1} parent=1 // pred_fallthru
      _
    // Predicated region
    $region22: #{rnn_forward_seq.1} parent=1 // pred_check
      _
    $region23: #{rnn_forward_seq.1} parent=1 // pred_check_branch
      %31 = sbr.rel (0) target = $region25
    $region24: #{rnn_forward_seq.1} parent=1 // pred_region
      _
    $region25: #{rnn_forward_seq.1} parent=1 // pred_fallthru
      _
    // Predicated region
    $region26: #{rnn_forward_seq.1} parent=1 // pred_check
      _
    $region27: #{rnn_forward_seq.1} parent=1 // pred_check_branch
      %33 = sbr.rel (0) target = $region29
    $region28: #{rnn_forward_seq.1} parent=1 // pred_region
      _
    $region29: #{rnn_forward_seq.1} parent=1 // pred_fallthru
      _
    // Predicated region
    $region30: #{rnn_forward_seq.1} parent=1 // pred_check
      _
    $region31: #{rnn_forward_seq.1} parent=1 // pred_check_branch
      %35 = sbr.rel (0) target = $region33
    $region32: #{rnn_forward_seq.1} parent=1 // pred_region
      _
    $region33: #{rnn_forward_seq.1} parent=1 // pred_fallthru
      _
    // Predicated region
    $region34: #{rnn_forward_seq.1} parent=1 // pred_check
      _
    $region35: #{rnn_forward_seq.1} parent=1 // pred_check_branch
      %37 = sbr.rel (0) target = $region37
    $region36: #{rnn_forward_seq.1} parent=1 // pred_region
      _
    $region37: #{rnn_forward_seq.1} parent=1 // pred_fallthru
      _
    // Predicated region
    $region38: #{rnn_forward_seq.1} parent=1 // pred_check
      _
    $region39: #{rnn_forward_seq.1} parent=1 // pred_check_branch
      %39 = sbr.rel (0) target = $region41
    $region40: #{rnn_forward_seq.1} parent=1 // pred_region
      _
    $region41: #{rnn_forward_seq.1} parent=1 // pred_fallthru
      _
    // Predicated region
    $region42: #{rnn_forward_seq.1} parent=1 // pred_check
      _
    $region43: #{rnn_forward_seq.1} parent=1 // pred_check_branch
      %41 = sbr.rel (0) target = $region45
    $region44: #{rnn_forward_seq.1} parent=1 // pred_region
      _
    $region45: #{rnn_forward_seq.1} parent=1 // pred_fallthru
      _
    %v42 = vld [vmem:[%s0] sm:$0xff]
    %v43 = vld [vmem:[%s0 + $0x8] sm:$0xff]
    %v44 = vld [vmem:[%s0 + $0x10] sm:$0xff]
    %v45 = vld [vmem:[%s0 + $0x18] sm:$0xff]
    %v46 = vld [vmem:[%s0 + $0x20] sm:$0xff]
    %v47 = vld [vmem:[%s0 + $0x28] sm:$0xff]
    %v48 = vld [vmem:[%s0 + $0x30] sm:$0xff]
    %v49 = vld [vmem:[%s0 + $0x38] sm:$0xff]
    %v50 = vld [vmem:[%s2] sm:$0xff]
    %v51 = vld [vmem:[%s2 + $0x8] sm:$0xff]
    %v52 = vld [vmem:[%s3] sm:$0x1]
    %v54 = vlaneseq
    %v55 = vshrl.u32 %v54, 7
    %v56 = vsub.s32 0, %v55
    %v57 = vrot.slane %v52, %v56
    %vm59 = vcmask 130048
    %v61 = vsel %vm59, %v42, 0
    %v64 = vsel %vm59, %v43, 0
    %v67 = vsel %vm59, %v44, 0
    %v70 = vsel %vm59, %v45, 0
    %v73 = vsel %vm59, %v46, 0
    %v76 = vsel %vm59, %v47, 0
    %v79 = vsel %vm59, %v48, 0
    %v82 = vsel %vm59, %v49, 0
    %84 = vmatprep.subr.mxu0 0.0
    %85 = vmatpush1.msra.mxu0 0.0
    %86 = vmatprep.subr.mxu0 0.0
    %87 = vmatpush1.msra.mxu0 0.0
    %88 = vmatprep.subr.mxu0 0.0
    %89 = vmatpush1.msra.mxu0 0.0
    %90 = vmatprep.subr.mxu0 0.0
    %91 = vmatpush1.msra.mxu0 0.0
    %92 = vmatprep.subr.mxu0 0.0
    %93 = vmatpush1.msra.mxu0 0.0
    %94 = vmatprep.subr.mxu0 0.0
    %95 = vmatpush1.msra.mxu0 0.0
    %96 = vmatprep.subr.mxu0 0.0
    %97 = vmatpush1.msra.mxu0 0.0
    %98 = vmatprep.subr.mxu0 0.0
    %99 = vmatpush1.msra.mxu0 0.0
    %100 = vmatprep.subr.mxu0 0.0
    %101 = vmatpush1.msra.mxu0 0.0
    %102 = vmatprep.subr.mxu0 0.0
    %103 = vmatpush1.msra.mxu0 0.0
    %104 = vmatprep.subr.mxu0 0.0
    %105 = vmatpush1.msra.mxu0 0.0
    %106 = vmatprep.subr.mxu0 0.0
    %107 = vmatpush1.msra.mxu0 0.0
    %108 = vmatprep.subr.mxu0 0.0
    %109 = vmatpush1.msra.mxu0 0.0
    %110 = vmatprep.subr.mxu0 0.0
    %111 = vmatpush1.msra.mxu0 0.0
    %112 = vmatprep.subr.mxu0 0.0
    %113 = vmatpush1.msra.mxu0 %v51
    %114 = vmatprep.subr.mxu0 0.0
    %115 = vmatpush1.msra.mxu0 %v50
    %116 = vmatprep.subr.mxu0 0.0
    %117 = vmatpush2.msra.mxu0 0.0
    %118 = vmatprep.subr.mxu0 0.0
    %119 = vmatpush2.msra.mxu0 0.0
    %120 = vmatprep.subr.mxu0 0.0
    %121 = vmatpush2.msra.mxu0 0.0
    %122 = vmatprep.subr.mxu0 0.0
    %123 = vmatpush2.msra.mxu0 0.0
    %124 = vmatprep.subr.mxu0 0.0
    %125 = vmatpush2.msra.mxu0 0.0
    %126 = vmatprep.subr.mxu0 0.0
    %127 = vmatpush2.msra.mxu0 0.0
    %128 = vmatprep.subr.mxu0 0.0
    %129 = vmatpush2.msra.mxu0 0.0
    %130 = vmatprep.subr.mxu0 0.0
    %131 = vmatpush2.msra.mxu0 0.0
    %132 = vmatprep.subr.mxu0 0.0
    %133 = vmatpush2.msra.mxu0 0.0
    %134 = vmatprep.subr.mxu0 0.0
    %135 = vmatpush2.msra.mxu0 0.0
    %136 = vmatprep.subr.mxu0 0.0
    %137 = vmatpush2.msra.mxu0 0.0
    %138 = vmatprep.subr.mxu0 0.0
    %139 = vmatpush2.msra.mxu0 0.0
    %140 = vmatprep.subr.mxu0 0.0
    %141 = vmatpush2.msra.mxu0 0.0
    %142 = vmatprep.subr.mxu0 0.0
    %143 = vmatpush2.msra.mxu0 0.0
    %144 = vmatprep.subr.mxu0 0.0
    %145 = vmatpush2.msra.mxu0 0.0
    %146 = vmatprep.subr.mxu0 0.0
    %147 = vmatpush2.msra.mxu0 0.0
    %148 = vmatprep.mubr.f32.mxu0 0.0
    %149 = vmatmul.mubr.f32.gmra.mxu0 %v61
    %v150 = vpop.f32.mrf.mxu0
    %v151 = vadd.f32 %v57, %v150
    %v152 = vpop.f32.mrf.mxu0
    %153 = vmatprep.mubr.f32.mxu0 0.0
    %154 = vmatmul.mubr.f32.gmra.mxu0 %v64
    %v155 = vpop.f32.mrf.mxu0
    %v156 = vadd.f32 %v57, %v155
    %v157 = vpop.f32.mrf.mxu0
    %158 = vmatprep.mubr.f32.mxu0 0.0
    %159 = vmatmul.mubr.f32.gmra.mxu0 %v67
    %v160 = vpop.f32.mrf.mxu0
    %v161 = vadd.f32 %v57, %v160
    %v162 = vpop.f32.mrf.mxu0
    %163 = vmatprep.mubr.f32.mxu0 0.0
    %164 = vmatmul.mubr.f32.gmra.mxu0 %v70
    %v165 = vpop.f32.mrf.mxu0
    %v166 = vadd.f32 %v57, %v165
    %v167 = vpop.f32.mrf.mxu0
    %168 = vmatprep.mubr.f32.mxu0 0.0
    %169 = vmatmul.mubr.f32.gmra.mxu0 %v73
    %v170 = vpop.f32.mrf.mxu0
    %v171 = vadd.f32 %v57, %v170
    %v172 = vpop.f32.mrf.mxu0
    %173 = vmatprep.mubr.f32.mxu0 0.0
    %174 = vmatmul.mubr.f32.gmra.mxu0 %v76
    %v175 = vpop.f32.mrf.mxu0
    %v176 = vadd.f32 %v57, %v175
    %v177 = vpop.f32.mrf.mxu0
    %178 = vmatprep.mubr.f32.mxu0 0.0
    %179 = vmatmul.mubr.f32.gmra.mxu0 %v79
    %v180 = vpop.f32.mrf.mxu0
    %v181 = vadd.f32 %v57, %v180
    %v182 = vpop.f32.mrf.mxu0
    %183 = vmatprep.mubr.f32.mxu0 0.0
    %184 = vmatmul.mubr.f32.gmra.mxu0 %v82
    %v185 = vpop.f32.mrf.mxu0
    %v186 = vadd.f32 %v57, %v185
    %v187 = vpop.f32.mrf.mxu0
    %188 = vdwg.mxu0
    %vm189 = vcmask 261120
    %190 = vst.msk [vmem:[#allocation2] sm:$0xff] %vm189, %v151
    %191 = vst.msk [vmem:[#allocation2 + $0x8] sm:$0xff] %vm189, %v156
    %192 = vst.msk [vmem:[#allocation2 + $0x10] sm:$0xff] %vm189, %v161
    %193 = vst.msk [vmem:[#allocation2 + $0x18] sm:$0xff] %vm189, %v166
    %194 = vst.msk [vmem:[#allocation2 + $0x20] sm:$0xff] %vm189, %v171
    %195 = vst.msk [vmem:[#allocation2 + $0x28] sm:$0xff] %vm189, %v176
    %196 = vst.msk [vmem:[#allocation2 + $0x30] sm:$0xff] %vm189, %v181
    %197 = vst.msk [vmem:[#allocation2 + $0x38] sm:$0xff] %vm189, %v186
    %v198 = vld [vmem:[%s1] sm:$0xff]
    %v199 = vld [vmem:[#allocation2] sm:$0xff]
    %v200 = vld [vmem:[%s4] sm:$0xff]
    %v201 = vld [vmem:[%s4 + $0x8] sm:$0xff]
    %v202 = vld [vmem:[%s4 + $0x10] sm:$0xff]
    %v203 = vld [vmem:[%s4 + $0x18] sm:$0xff]
    %v205 = vsel %vm189, %v198, 0
    %207 = vmatprep.subr.mxu0 0.0
    %208 = vmatpush1.msra.mxu0 0.0
    %209 = vmatprep.subr.mxu0 0.0
    %210 = vmatpush1.msra.mxu0 0.0
    %211 = vmatprep.subr.mxu0 0.0
    %212 = vmatpush1.msra.mxu0 0.0
    %213 = vmatprep.subr.mxu0 0.0
    %214 = vmatpush1.msra.mxu0 0.0
    %215 = vmatprep.subr.mxu0 0.0
    %216 = vmatpush1.msra.mxu0 0.0
    %217 = vmatprep.subr.mxu0 0.0
    %218 = vmatpush1.msra.mxu0 0.0
    %219 = vmatprep.subr.mxu0 0.0
    %220 = vmatpush1.msra.mxu0 0.0
    %221 = vmatprep.subr.mxu0 0.0
    %222 = vmatpush1.msra.mxu0 0.0
    %223 = vmatprep.subr.mxu0 0.0
    %224 = vmatpush1.msra.mxu0 0.0
    %225 = vmatprep.subr.mxu0 0.0
    %226 = vmatpush1.msra.mxu0 0.0
    %227 = vmatprep.subr.mxu0 0.0
    %228 = vmatpush1.msra.mxu0 0.0
    %229 = vmatprep.subr.mxu0 0.0
    %230 = vmatpush1.msra.mxu0 0.0
    %231 = vmatprep.subr.mxu0 0.0
    %232 = vmatpush1.msra.mxu0 %v203
    %233 = vmatprep.subr.mxu0 0.0
    %234 = vmatpush1.msra.mxu0 %v202
    %235 = vmatprep.subr.mxu0 0.0
    %236 = vmatpush1.msra.mxu0 %v201
    %237 = vmatprep.subr.mxu0 0.0
    %238 = vmatpush1.msra.mxu0 %v200
    %239 = vmatprep.subr.mxu0 0.0
    %240 = vmatpush2.msra.mxu0 0.0
    %241 = vmatprep.subr.mxu0 0.0
    %242 = vmatpush2.msra.mxu0 0.0
    %243 = vmatprep.subr.mxu0 0.0
    %244 = vmatpush2.msra.mxu0 0.0
    %245 = vmatprep.subr.mxu0 0.0
    %246 = vmatpush2.msra.mxu0 0.0
    %247 = vmatprep.subr.mxu0 0.0
    %248 = vmatpush2.msra.mxu0 0.0
    %249 = vmatprep.subr.mxu0 0.0
    %250 = vmatpush2.msra.mxu0 0.0
    %251 = vmatprep.subr.mxu0 0.0
    %252 = vmatpush2.msra.mxu0 0.0
    %253 = vmatprep.subr.mxu0 0.0
    %254 = vmatpush2.msra.mxu0 0.0
    %255 = vmatprep.subr.mxu0 0.0
    %256 = vmatpush2.msra.mxu0 0.0
    %257 = vmatprep.subr.mxu0 0.0
    %258 = vmatpush2.msra.mxu0 0.0
    %259 = vmatprep.subr.mxu0 0.0
    %260 = vmatpush2.msra.mxu0 0.0
    %261 = vmatprep.subr.mxu0 0.0
    %262 = vmatpush2.msra.mxu0 0.0
    %263 = vmatprep.subr.mxu0 0.0
    %264 = vmatpush2.msra.mxu0 0.0
    %265 = vmatprep.subr.mxu0 0.0
    %266 = vmatpush2.msra.mxu0 0.0
    %267 = vmatprep.subr.mxu0 0.0
    %268 = vmatpush2.msra.mxu0 0.0
    %269 = vmatprep.subr.mxu0 0.0
    %270 = vmatpush2.msra.mxu0 0.0
    %271 = vmatprep.mubr.f32.mxu0 0.0
    %272 = vmatmul.mubr.f32.gmra.mxu0 %v205
    %v273 = vpop.f32.mrf.mxu0
    %v274 = vadd.f32 0.0, %v273
    %v275 = vpop.f32.mrf.mxu0
    %276 = vdwg.mxu0
    %v277 = vadd.f32 %v199, %v274
    %v278 = vtanh.pop %v277
    %v279 = vld [vmem:[%s5] sm:$0xff]
    %v280 = vld [vmem:[%s5 + $0x8] sm:$0xff]
    %v281 = vld [vmem:[%s5 + $0x10] sm:$0xff]
    %v282 = vld [vmem:[%s5 + $0x18] sm:$0xff]
    %v283 = vld [vmem:[%s6] sm:$0x1]
    %v285 = vlaneseq
    %v286 = vshrl.u32 %v285, 7
    %v287 = vsub.s32 0, %v286
    %v288 = vrot.slane %v283, %v287
    %v291 = vsel %vm189, %v278, 0
    %293 = vmatprep.subr.mxu0 0.0
    %294 = vmatpush1.msra.mxu0 0.0
    %295 = vmatprep.subr.mxu0 0.0
    %296 = vmatpush1.msra.mxu0 0.0
    %297 = vmatprep.subr.mxu0 0.0
    %298 = vmatpush1.msra.mxu0 0.0
    %299 = vmatprep.subr.mxu0 0.0
    %300 = vmatpush1.msra.mxu0 0.0
    %301 = vmatprep.subr.mxu0 0.0
    %302 = vmatpush1.msra.mxu0 0.0
    %303 = vmatprep.subr.mxu0 0.0
    %304 = vmatpush1.msra.mxu0 0.0
    %305 = vmatprep.subr.mxu0 0.0
    %306 = vmatpush1.msra.mxu0 0.0
    %307 = vmatprep.subr.mxu0 0.0
    %308 = vmatpush1.msra.mxu0 0.0
    %309 = vmatprep.subr.mxu0 0.0
    %310 = vmatpush1.msra.mxu0 0.0
    %311 = vmatprep.subr.mxu0 0.0
    %312 = vmatpush1.msra.mxu0 0.0
    %313 = vmatprep.subr.mxu0 0.0
    %314 = vmatpush1.msra.mxu0 0.0
    %315 = vmatprep.subr.mxu0 0.0
    %316 = vmatpush1.msra.mxu0 0.0
    %317 = vmatprep.subr.mxu0 0.0
    %318 = vmatpush1.msra.mxu0 %v282
    %319 = vmatprep.subr.mxu0 0.0
    %320 = vmatpush1.msra.mxu0 %v281
    %321 = vmatprep.subr.mxu0 0.0
    %322 = vmatpush1.msra.mxu0 %v280
    %323 = vmatprep.subr.mxu0 0.0
    %324 = vmatpush1.msra.mxu0 %v279
    %325 = vmatprep.subr.mxu0 0.0
    %326 = vmatpush2.msra.mxu0 0.0
    %327 = vmatprep.subr.mxu0 0.0
    %328 = vmatpush2.msra.mxu0 0.0
    %329 = vmatprep.subr.mxu0 0.0
    %330 = vmatpush2.msra.mxu0 0.0
    %331 = vmatprep.subr.mxu0 0.0
    %332 = vmatpush2.msra.mxu0 0.0
    %333 = vmatprep.subr.mxu0 0.0
    %334 = vmatpush2.msra.mxu0 0.0
    %335 = vmatprep.subr.mxu0 0.0
    %336 = vmatpush2.msra.mxu0 0.0
    %337 = vmatprep.subr.mxu0 0.0
    %338 = vmatpush2.msra.mxu0 0.0
    %339 = vmatprep.subr.mxu0 0.0
    %340 = vmatpush2.msra.mxu0 0.0
    %341 = vmatprep.subr.mxu0 0.0
    %342 = vmatpush2.msra.mxu0 0.0
    %343 = vmatprep.subr.mxu0 0.0
    %344 = vmatpush2.msra.mxu0 0.0
    %345 = vmatprep.subr.mxu0 0.0
    %346 = vmatpush2.msra.mxu0 0.0
    %347 = vmatprep.subr.mxu0 0.0
    %348 = vmatpush2.msra.mxu0 0.0
    %349 = vmatprep.subr.mxu0 0.0
    %350 = vmatpush2.msra.mxu0 0.0
    %351 = vmatprep.subr.mxu0 0.0
    %352 = vmatpush2.msra.mxu0 0.0
    %353 = vmatprep.subr.mxu0 0.0
    %354 = vmatpush2.msra.mxu0 0.0
    %355 = vmatprep.subr.mxu0 0.0
    %356 = vmatpush2.msra.mxu0 0.0
    %357 = vmatprep.mubr.f32.mxu0 0.0
    %358 = vmatmul.mubr.f32.gmra.mxu0 %v291
    %v359 = vpop.f32.mrf.mxu0
    %v360 = vadd.f32 %v288, %v359
    %v361 = vpop.f32.mrf.mxu0
    %362 = vdwg.mxu0
    %v363 = vtanh.pop %v360
    %364 = vst.msk [vmem:[#allocation5] sm:$0xff] %vm189, %v363
    %s365 = scalar_lea.vmem [#allocation2], 8
    %v366 = vld [vmem:[%s365] sm:$0xff]
    %v367 = vld [vmem:[%s4] sm:$0xff]
    %v368 = vld [vmem:[%s4 + $0x8] sm:$0xff]
    %v369 = vld [vmem:[%s4 + $0x10] sm:$0xff]
    %v370 = vld [vmem:[%s4 + $0x18] sm:$0xff]
    %v372 = vsel %vm189, %v363, 0
    %374 = vmatprep.subr.mxu0 0.0
    %375 = vmatpush1.msra.mxu0 0.0
    %376 = vmatprep.subr.mxu0 0.0
    %377 = vmatpush1.msra.mxu0 0.0
    %378 = vmatprep.subr.mxu0 0.0
    %379 = vmatpush1.msra.mxu0 0.0
    %380 = vmatprep.subr.mxu0 0.0
    %381 = vmatpush1.msra.mxu0 0.0
    %382 = vmatprep.subr.mxu0 0.0
    %383 = vmatpush1.msra.mxu0 0.0
    %384 = vmatprep.subr.mxu0 0.0
    %385 = vmatpush1.msra.mxu0 0.0
    %386 = vmatprep.subr.mxu0 0.0
    %387 = vmatpush1.msra.mxu0 0.0
    %388 = vmatprep.subr.mxu0 0.0
    %389 = vmatpush1.msra.mxu0 0.0
    %390 = vmatprep.subr.mxu0 0.0
    %391 = vmatpush1.msra.mxu0 0.0
    %392 = vmatprep.subr.mxu0 0.0
    %393 = vmatpush1.msra.mxu0 0.0
    %394 = vmatprep.subr.mxu0 0.0
    %395 = vmatpush1.msra.mxu0 0.0
    %396 = vmatprep.subr.mxu0 0.0
    %397 = vmatpush1.msra.mxu0 0.0
    %398 = vmatprep.subr.mxu0 0.0
    %399 = vmatpush1.msra.mxu0 %v370
    %400 = vmatprep.subr.mxu0 0.0
    %401 = vmatpush1.msra.mxu0 %v369
    %402 = vmatprep.subr.mxu0 0.0
    %403 = vmatpush1.msra.mxu0 %v368
    %404 = vmatprep.subr.mxu0 0.0
    %405 = vmatpush1.msra.mxu0 %v367
    %406 = vmatprep.subr.mxu0 0.0
    %407 = vmatpush2.msra.mxu0 0.0
    %408 = vmatprep.subr.mxu0 0.0
    %409 = vmatpush2.msra.mxu0 0.0
    %410 = vmatprep.subr.mxu0 0.0
    %411 = vmatpush2.msra.mxu0 0.0
    %412 = vmatprep.subr.mxu0 0.0
    %413 = vmatpush2.msra.mxu0 0.0
    %414 = vmatprep.subr.mxu0 0.0
    %415 = vmatpush2.msra.mxu0 0.0
    %416 = vmatprep.subr.mxu0 0.0
    %417 = vmatpush2.msra.mxu0 0.0
    %418 = vmatprep.subr.mxu0 0.0
    %419 = vmatpush2.msra.mxu0 0.0
    %420 = vmatprep.subr.mxu0 0.0
    %421 = vmatpush2.msra.mxu0 0.0
    %422 = vmatprep.subr.mxu0 0.0
    %423 = vmatpush2.msra.mxu0 0.0
    %424 = vmatprep.subr.mxu0 0.0
    %425 = vmatpush2.msra.mxu0 0.0
    %426 = vmatprep.subr.mxu0 0.0
    %427 = vmatpush2.msra.mxu0 0.0
    %428 = vmatprep.subr.mxu0 0.0
    %429 = vmatpush2.msra.mxu0 0.0
    %430 = vmatprep.subr.mxu0 0.0
    %431 = vmatpush2.msra.mxu0 0.0
    %432 = vmatprep.subr.mxu0 0.0
    %433 = vmatpush2.msra.mxu0 0.0
    %434 = vmatprep.subr.mxu0 0.0
    %435 = vmatpush2.msra.mxu0 0.0
    %436 = vmatprep.subr.mxu0 0.0
    %437 = vmatpush2.msra.mxu0 0.0
    %438 = vmatprep.mubr.f32.mxu0 0.0
    %439 = vmatmul.mubr.f32.gmra.mxu0 %v372
    %v440 = vpop.f32.mrf.mxu0
    %v441 = vadd.f32 0.0, %v440
    %v442 = vpop.f32.mrf.mxu0
    %443 = vdwg.mxu0
    %v444 = vadd.f32 %v366, %v441
    %v445 = vtanh.pop %v444
    %v446 = vld [vmem:[%s5] sm:$0xff]
    %v447 = vld [vmem:[%s5 + $0x8] sm:$0xff]
    %v448 = vld [vmem:[%s5 + $0x10] sm:$0xff]
    %v449 = vld [vmem:[%s5 + $0x18] sm:$0xff]
    %v450 = vld [vmem:[%s6] sm:$0x1]
    %v452 = vlaneseq
    %v453 = vshrl.u32 %v452, 7
    %v454 = vsub.s32 0, %v453
    %v455 = vrot.slane %v450, %v454
    %v458 = vsel %vm189, %v445, 0
    %460 = vmatprep.subr.mxu0 0.0
    %461 = vmatpush1.msra.mxu0 0.0
    %462 = vmatprep.subr.mxu0 0.0
    %463 = vmatpush1.msra.mxu0 0.0
    %464 = vmatprep.subr.mxu0 0.0
    %465 = vmatpush1.msra.mxu0 0.0
    %466 = vmatprep.subr.mxu0 0.0
    %467 = vmatpush1.msra.mxu0 0.0
    %468 = vmatprep.subr.mxu0 0.0
    %469 = vmatpush1.msra.mxu0 0.0
    %470 = vmatprep.subr.mxu0 0.0
    %471 = vmatpush1.msra.mxu0 0.0
    %472 = vmatprep.subr.mxu0 0.0
    %473 = vmatpush1.msra.mxu0 0.0
    %474 = vmatprep.subr.mxu0 0.0
    %475 = vmatpush1.msra.mxu0 0.0
    %476 = vmatprep.subr.mxu0 0.0
    %477 = vmatpush1.msra.mxu0 0.0
    %478 = vmatprep.subr.mxu0 0.0
    %479 = vmatpush1.msra.mxu0 0.0
    %480 = vmatprep.subr.mxu0 0.0
    %481 = vmatpush1.msra.mxu0 0.0
    %482 = vmatprep.subr.mxu0 0.0
    %483 = vmatpush1.msra.mxu0 0.0
    %484 = vmatprep.subr.mxu0 0.0
    %485 = vmatpush1.msra.mxu0 %v449
    %486 = vmatprep.subr.mxu0 0.0
    %487 = vmatpush1.msra.mxu0 %v448
    %488 = vmatprep.subr.mxu0 0.0
    %489 = vmatpush1.msra.mxu0 %v447
    %490 = vmatprep.subr.mxu0 0.0
    %491 = vmatpush1.msra.mxu0 %v446
    %492 = vmatprep.subr.mxu0 0.0
    %493 = vmatpush2.msra.mxu0 0.0
    %494 = vmatprep.subr.mxu0 0.0
    %495 = vmatpush2.msra.mxu0 0.0
    %496 = vmatprep.subr.mxu0 0.0
    %497 = vmatpush2.msra.mxu0 0.0
    %498 = vmatprep.subr.mxu0 0.0
    %499 = vmatpush2.msra.mxu0 0.0
    %500 = vmatprep.subr.mxu0 0.0
    %501 = vmatpush2.msra.mxu0 0.0
    %502 = vmatprep.subr.mxu0 0.0
    %503 = vmatpush2.msra.mxu0 0.0
    %504 = vmatprep.subr.mxu0 0.0
    %505 = vmatpush2.msra.mxu0 0.0
    %506 = vmatprep.subr.mxu0 0.0
    %507 = vmatpush2.msra.mxu0 0.0
    %508 = vmatprep.subr.mxu0 0.0
    %509 = vmatpush2.msra.mxu0 0.0
    %510 = vmatprep.subr.mxu0 0.0
    %511 = vmatpush2.msra.mxu0 0.0
    %512 = vmatprep.subr.mxu0 0.0
    %513 = vmatpush2.msra.mxu0 0.0
    %514 = vmatprep.subr.mxu0 0.0
    %515 = vmatpush2.msra.mxu0 0.0
    %516 = vmatprep.subr.mxu0 0.0
    %517 = vmatpush2.msra.mxu0 0.0
    %518 = vmatprep.subr.mxu0 0.0
    %519 = vmatpush2.msra.mxu0 0.0
    %520 = vmatprep.subr.mxu0 0.0
    %521 = vmatpush2.msra.mxu0 0.0
    %522 = vmatprep.subr.mxu0 0.0
    %523 = vmatpush2.msra.mxu0 0.0
    %524 = vmatprep.mubr.f32.mxu0 0.0
    %525 = vmatmul.mubr.f32.gmra.mxu0 %v458
    %v526 = vpop.f32.mrf.mxu0
    %v527 = vadd.f32 %v455, %v526
    %v528 = vpop.f32.mrf.mxu0
    %529 = vdwg.mxu0
    %v530 = vtanh.pop %v527
    %s531 = scalar_lea.vmem [#allocation5], 8
    %532 = vst.msk [vmem:[%s531] sm:$0xff] %vm189, %v530
    %s533 = scalar_lea.vmem [#allocation2], 16
    %v534 = vld [vmem:[%s533] sm:$0xff]
    %v535 = vld [vmem:[%s4] sm:$0xff]
    %v536 = vld [vmem:[%s4 + $0x8] sm:$0xff]
    %v537 = vld [vmem:[%s4 + $0x10] sm:$0xff]
    %v538 = vld [vmem:[%s4 + $0x18] sm:$0xff]
    %v540 = vsel %vm189, %v530, 0
    %542 = vmatprep.subr.mxu0 0.0
    %543 = vmatpush1.msra.mxu0 0.0
    %544 = vmatprep.subr.mxu0 0.0
    %545 = vmatpush1.msra.mxu0 0.0
    %546 = vmatprep.subr.mxu0 0.0
    %547 = vmatpush1.msra.mxu0 0.0
    %548 = vmatprep.subr.mxu0 0.0
    %549 = vmatpush1.msra.mxu0 0.0
    %550 = vmatprep.subr.mxu0 0.0
    %551 = vmatpush1.msra.mxu0 0.0
    %552 = vmatprep.subr.mxu0 0.0
    %553 = vmatpush1.msra.mxu0 0.0
    %554 = vmatprep.subr.mxu0 0.0
    %555 = vmatpush1.msra.mxu0 0.0
    %556 = vmatprep.subr.mxu0 0.0
    %557 = vmatpush1.msra.mxu0 0.0
    %558 = vmatprep.subr.mxu0 0.0
    %559 = vmatpush1.msra.mxu0 0.0
    %560 = vmatprep.subr.mxu0 0.0
    %561 = vmatpush1.msra.mxu0 0.0
    %562 = vmatprep.subr.mxu0 0.0
    %563 = vmatpush1.msra.mxu0 0.0
    %564 = vmatprep.subr.mxu0 0.0
    %565 = vmatpush1.msra.mxu0 0.0
    %566 = vmatprep.subr.mxu0 0.0
    %567 = vmatpush1.msra.mxu0 %v538
    %568 = vmatprep.subr.mxu0 0.0
    %569 = vmatpush1.msra.mxu0 %v537
    %570 = vmatprep.subr.mxu0 0.0
    %571 = vmatpush1.msra.mxu0 %v536
    %572 = vmatprep.subr.mxu0 0.0
    %573 = vmatpush1.msra.mxu0 %v535
    %574 = vmatprep.subr.mxu0 0.0
    %575 = vmatpush2.msra.mxu0 0.0
    %576 = vmatprep.subr.mxu0 0.0
    %577 = vmatpush2.msra.mxu0 0.0
    %578 = vmatprep.subr.mxu0 0.0
    %579 = vmatpush2.msra.mxu0 0.0
    %580 = vmatprep.subr.mxu0 0.0
    %581 = vmatpush2.msra.mxu0 0.0
    %582 = vmatprep.subr.mxu0 0.0
    %583 = vmatpush2.msra.mxu0 0.0
    %584 = vmatprep.subr.mxu0 0.0
    %585 = vmatpush2.msra.mxu0 0.0
    %586 = vmatprep.subr.mxu0 0.0
    %587 = vmatpush2.msra.mxu0 0.0
    %588 = vmatprep.subr.mxu0 0.0
    %589 = vmatpush2.msra.mxu0 0.0
    %590 = vmatprep.subr.mxu0 0.0
    %591 = vmatpush2.msra.mxu0 0.0
    %592 = vmatprep.subr.mxu0 0.0
    %593 = vmatpush2.msra.mxu0 0.0
    %594 = vmatprep.subr.mxu0 0.0
    %595 = vmatpush2.msra.mxu0 0.0
    %596 = vmatprep.subr.mxu0 0.0
    %597 = vmatpush2.msra.mxu0 0.0
    %598 = vmatprep.subr.mxu0 0.0
    %599 = vmatpush2.msra.mxu0 0.0
    %600 = vmatprep.subr.mxu0 0.0
    %601 = vmatpush2.msra.mxu0 0.0
    %602 = vmatprep.subr.mxu0 0.0
    %603 = vmatpush2.msra.mxu0 0.0
    %604 = vmatprep.subr.mxu0 0.0
    %605 = vmatpush2.msra.mxu0 0.0
    %606 = vmatprep.mubr.f32.mxu0 0.0
    %607 = vmatmul.mubr.f32.gmra.mxu0 %v540
    %v608 = vpop.f32.mrf.mxu0
    %v609 = vadd.f32 0.0, %v608
    %v610 = vpop.f32.mrf.mxu0
    %611 = vdwg.mxu0
    %v612 = vadd.f32 %v534, %v609
    %v613 = vtanh.pop %v612
    %v614 = vld [vmem:[%s5] sm:$0xff]
    %v615 = vld [vmem:[%s5 + $0x8] sm:$0xff]
    %v616 = vld [vmem:[%s5 + $0x10] sm:$0xff]
    %v617 = vld [vmem:[%s5 + $0x18] sm:$0xff]
    %v618 = vld [vmem:[%s6] sm:$0x1]
    %v620 = vlaneseq
    %v621 = vshrl.u32 %v620, 7
    %v622 = vsub.s32 0, %v621
    %v623 = vrot.slane %v618, %v622
    %v626 = vsel %vm189, %v613, 0
    %628 = vmatprep.subr.mxu0 0.0
    %629 = vmatpush1.msra.mxu0 0.0
    %630 = vmatprep.subr.mxu0 0.0
    %631 = vmatpush1.msra.mxu0 0.0
    %632 = vmatprep.subr.mxu0 0.0
    %633 = vmatpush1.msra.mxu0 0.0
    %634 = vmatprep.subr.mxu0 0.0
    %635 = vmatpush1.msra.mxu0 0.0
    %636 = vmatprep.subr.mxu0 0.0
    %637 = vmatpush1.msra.mxu0 0.0
    %638 = vmatprep.subr.mxu0 0.0
    %639 = vmatpush1.msra.mxu0 0.0
    %640 = vmatprep.subr.mxu0 0.0
    %641 = vmatpush1.msra.mxu0 0.0
    %642 = vmatprep.subr.mxu0 0.0
    %643 = vmatpush1.msra.mxu0 0.0
    %644 = vmatprep.subr.mxu0 0.0
    %645 = vmatpush1.msra.mxu0 0.0
    %646 = vmatprep.subr.mxu0 0.0
    %647 = vmatpush1.msra.mxu0 0.0
    %648 = vmatprep.subr.mxu0 0.0
    %649 = vmatpush1.msra.mxu0 0.0
    %650 = vmatprep.subr.mxu0 0.0
    %651 = vmatpush1.msra.mxu0 0.0
    %652 = vmatprep.subr.mxu0 0.0
    %653 = vmatpush1.msra.mxu0 %v617
    %654 = vmatprep.subr.mxu0 0.0
    %655 = vmatpush1.msra.mxu0 %v616
    %656 = vmatprep.subr.mxu0 0.0
    %657 = vmatpush1.msra.mxu0 %v615
    %658 = vmatprep.subr.mxu0 0.0
    %659 = vmatpush1.msra.mxu0 %v614
    %660 = vmatprep.subr.mxu0 0.0
    %661 = vmatpush2.msra.mxu0 0.0
    %662 = vmatprep.subr.mxu0 0.0
    %663 = vmatpush2.msra.mxu0 0.0
    %664 = vmatprep.subr.mxu0 0.0
    %665 = vmatpush2.msra.mxu0 0.0
    %666 = vmatprep.subr.mxu0 0.0
    %667 = vmatpush2.msra.mxu0 0.0
    %668 = vmatprep.subr.mxu0 0.0
    %669 = vmatpush2.msra.mxu0 0.0
    %670 = vmatprep.subr.mxu0 0.0
    %671 = vmatpush2.msra.mxu0 0.0
    %672 = vmatprep.subr.mxu0 0.0
    %673 = vmatpush2.msra.mxu0 0.0
    %674 = vmatprep.subr.mxu0 0.0
    %675 = vmatpush2.msra.mxu0 0.0
    %676 = vmatprep.subr.mxu0 0.0
    %677 = vmatpush2.msra.mxu0 0.0
    %678 = vmatprep.subr.mxu0 0.0
    %679 = vmatpush2.msra.mxu0 0.0
    %680 = vmatprep.subr.mxu0 0.0
    %681 = vmatpush2.msra.mxu0 0.0
    %682 = vmatprep.subr.mxu0 0.0
    %683 = vmatpush2.msra.mxu0 0.0
    %684 = vmatprep.subr.mxu0 0.0
    %685 = vmatpush2.msra.mxu0 0.0
    %686 = vmatprep.subr.mxu0 0.0
    %687 = vmatpush2.msra.mxu0 0.0
    %688 = vmatprep.subr.mxu0 0.0
    %689 = vmatpush2.msra.mxu0 0.0
    %690 = vmatprep.subr.mxu0 0.0
    %691 = vmatpush2.msra.mxu0 0.0
    %692 = vmatprep.mubr.f32.mxu0 0.0
    %693 = vmatmul.mubr.f32.gmra.mxu0 %v626
    %v694 = vpop.f32.mrf.mxu0
    %v695 = vadd.f32 %v623, %v694
    %v696 = vpop.f32.mrf.mxu0
    %697 = vdwg.mxu0
    %v698 = vtanh.pop %v695
    %s699 = scalar_lea.vmem [#allocation5], 16
    %700 = vst.msk [vmem:[%s699] sm:$0xff] %vm189, %v698
    %s701 = scalar_lea.vmem [#allocation2], 24
    %v702 = vld [vmem:[%s701] sm:$0xff]
    %v703 = vld [vmem:[%s4] sm:$0xff]
    %v704 = vld [vmem:[%s4 + $0x8] sm:$0xff]
    %v705 = vld [vmem:[%s4 + $0x10] sm:$0xff]
    %v706 = vld [vmem:[%s4 + $0x18] sm:$0xff]
    %v708 = vsel %vm189, %v698, 0
    %710 = vmatprep.subr.mxu0 0.0
    %711 = vmatpush1.msra.mxu0 0.0
    %712 = vmatprep.subr.mxu0 0.0
    %713 = vmatpush1.msra.mxu0 0.0
    %714 = vmatprep.subr.mxu0 0.0
    %715 = vmatpush1.msra.mxu0 0.0
    %716 = vmatprep.subr.mxu0 0.0
    %717 = vmatpush1.msra.mxu0 0.0
    %718 = vmatprep.subr.mxu0 0.0
    %719 = vmatpush1.msra.mxu0 0.0
    %720 = vmatprep.subr.mxu0 0.0
    %721 = vmatpush1.msra.mxu0 0.0
    %722 = vmatprep.subr.mxu0 0.0
    %723 = vmatpush1.msra.mxu0 0.0
    %724 = vmatprep.subr.mxu0 0.0
    %725 = vmatpush1.msra.mxu0 0.0
    %726 = vmatprep.subr.mxu0 0.0
    %727 = vmatpush1.msra.mxu0 0.0
    %728 = vmatprep.subr.mxu0 0.0
    %729 = vmatpush1.msra.mxu0 0.0
    %730 = vmatprep.subr.mxu0 0.0
    %731 = vmatpush1.msra.mxu0 0.0
    %732 = vmatprep.subr.mxu0 0.0
    %733 = vmatpush1.msra.mxu0 0.0
    %734 = vmatprep.subr.mxu0 0.0
    %735 = vmatpush1.msra.mxu0 %v706
    %736 = vmatprep.subr.mxu0 0.0
    %737 = vmatpush1.msra.mxu0 %v705
    %738 = vmatprep.subr.mxu0 0.0
    %739 = vmatpush1.msra.mxu0 %v704
    %740 = vmatprep.subr.mxu0 0.0
    %741 = vmatpush1.msra.mxu0 %v703
    %742 = vmatprep.subr.mxu0 0.0
    %743 = vmatpush2.msra.mxu0 0.0
    %744 = vmatprep.subr.mxu0 0.0
    %745 = vmatpush2.msra.mxu0 0.0
    %746 = vmatprep.subr.mxu0 0.0
    %747 = vmatpush2.msra.mxu0 0.0
    %748 = vmatprep.subr.mxu0 0.0
    %749 = vmatpush2.msra.mxu0 0.0
    %750 = vmatprep.subr.mxu0 0.0
    %751 = vmatpush2.msra.mxu0 0.0
    %752 = vmatprep.subr.mxu0 0.0
    %753 = vmatpush2.msra.mxu0 0.0
    %754 = vmatprep.subr.mxu0 0.0
    %755 = vmatpush2.msra.mxu0 0.0
    %756 = vmatprep.subr.mxu0 0.0
    %757 = vmatpush2.msra.mxu0 0.0
    %758 = vmatprep.subr.mxu0 0.0
    %759 = vmatpush2.msra.mxu0 0.0
    %760 = vmatprep.subr.mxu0 0.0
    %761 = vmatpush2.msra.mxu0 0.0
    %762 = vmatprep.subr.mxu0 0.0
    %763 = vmatpush2.msra.mxu0 0.0
    %764 = vmatprep.subr.mxu0 0.0
    %765 = vmatpush2.msra.mxu0 0.0
    %766 = vmatprep.subr.mxu0 0.0
    %767 = vmatpush2.msra.mxu0 0.0
    %768 = vmatprep.subr.mxu0 0.0
    %769 = vmatpush2.msra.mxu0 0.0
    %770 = vmatprep.subr.mxu0 0.0
    %771 = vmatpush2.msra.mxu0 0.0
    %772 = vmatprep.subr.mxu0 0.0
    %773 = vmatpush2.msra.mxu0 0.0
    %774 = vmatprep.mubr.f32.mxu0 0.0
    %775 = vmatmul.mubr.f32.gmra.mxu0 %v708
    %v776 = vpop.f32.mrf.mxu0
    %v777 = vadd.f32 0.0, %v776
    %v778 = vpop.f32.mrf.mxu0
    %779 = vdwg.mxu0
    %v780 = vadd.f32 %v702, %v777
    %v781 = vtanh.pop %v780
    %v782 = vld [vmem:[%s5] sm:$0xff]
    %v783 = vld [vmem:[%s5 + $0x8] sm:$0xff]
    %v784 = vld [vmem:[%s5 + $0x10] sm:$0xff]
    %v785 = vld [vmem:[%s5 + $0x18] sm:$0xff]
    %v786 = vld [vmem:[%s6] sm:$0x1]
    %v788 = vlaneseq
    %v789 = vshrl.u32 %v788, 7
    %v790 = vsub.s32 0, %v789
    %v791 = vrot.slane %v786, %v790
    %v794 = vsel %vm189, %v781, 0
    %796 = vmatprep.subr.mxu0 0.0
    %797 = vmatpush1.msra.mxu0 0.0
    %798 = vmatprep.subr.mxu0 0.0
    %799 = vmatpush1.msra.mxu0 0.0
    %800 = vmatprep.subr.mxu0 0.0
    %801 = vmatpush1.msra.mxu0 0.0
    %802 = vmatprep.subr.mxu0 0.0
    %803 = vmatpush1.msra.mxu0 0.0
    %804 = vmatprep.subr.mxu0 0.0
    %805 = vmatpush1.msra.mxu0 0.0
    %806 = vmatprep.subr.mxu0 0.0
    %807 = vmatpush1.msra.mxu0 0.0
    %808 = vmatprep.subr.mxu0 0.0
    %809 = vmatpush1.msra.mxu0 0.0
    %810 = vmatprep.subr.mxu0 0.0
    %811 = vmatpush1.msra.mxu0 0.0
    %812 = vmatprep.subr.mxu0 0.0
    %813 = vmatpush1.msra.mxu0 0.0
    %814 = vmatprep.subr.mxu0 0.0
    %815 = vmatpush1.msra.mxu0 0.0
    %816 = vmatprep.subr.mxu0 0.0
    %817 = vmatpush1.msra.mxu0 0.0
    %818 = vmatprep.subr.mxu0 0.0
    %819 = vmatpush1.msra.mxu0 0.0
    %820 = vmatprep.subr.mxu0 0.0
    %821 = vmatpush1.msra.mxu0 %v785
    %822 = vmatprep.subr.mxu0 0.0
    %823 = vmatpush1.msra.mxu0 %v784
    %824 = vmatprep.subr.mxu0 0.0
    %825 = vmatpush1.msra.mxu0 %v783
    %826 = vmatprep.subr.mxu0 0.0
    %827 = vmatpush1.msra.mxu0 %v782
    %828 = vmatprep.subr.mxu0 0.0
    %829 = vmatpush2.msra.mxu0 0.0
    %830 = vmatprep.subr.mxu0 0.0
    %831 = vmatpush2.msra.mxu0 0.0
    %832 = vmatprep.subr.mxu0 0.0
    %833 = vmatpush2.msra.mxu0 0.0
    %834 = vmatprep.subr.mxu0 0.0
    %835 = vmatpush2.msra.mxu0 0.0
    %836 = vmatprep.subr.mxu0 0.0
    %837 = vmatpush2.msra.mxu0 0.0
    %838 = vmatprep.subr.mxu0 0.0
    %839 = vmatpush2.msra.mxu0 0.0
    %840 = vmatprep.subr.mxu0 0.0
    %841 = vmatpush2.msra.mxu0 0.0
    %842 = vmatprep.subr.mxu0 0.0
    %843 = vmatpush2.msra.mxu0 0.0
    %844 = vmatprep.subr.mxu0 0.0
    %845 = vmatpush2.msra.mxu0 0.0
    %846 = vmatprep.subr.mxu0 0.0
    %847 = vmatpush2.msra.mxu0 0.0
    %848 = vmatprep.subr.mxu0 0.0
    %849 = vmatpush2.msra.mxu0 0.0
    %850 = vmatprep.subr.mxu0 0.0
    %851 = vmatpush2.msra.mxu0 0.0
    %852 = vmatprep.subr.mxu0 0.0
    %853 = vmatpush2.msra.mxu0 0.0
    %854 = vmatprep.subr.mxu0 0.0
    %855 = vmatpush2.msra.mxu0 0.0
    %856 = vmatprep.subr.mxu0 0.0
    %857 = vmatpush2.msra.mxu0 0.0
    %858 = vmatprep.subr.mxu0 0.0
    %859 = vmatpush2.msra.mxu0 0.0
    %860 = vmatprep.mubr.f32.mxu0 0.0
    %861 = vmatmul.mubr.f32.gmra.mxu0 %v794
    %v862 = vpop.f32.mrf.mxu0
    %v863 = vadd.f32 %v791, %v862
    %v864 = vpop.f32.mrf.mxu0
    %865 = vdwg.mxu0
    %v866 = vtanh.pop %v863
    %s867 = scalar_lea.vmem [#allocation5], 24
    %868 = vst.msk [vmem:[%s867] sm:$0xff] %vm189, %v866
    %s869 = scalar_lea.vmem [#allocation2], 32
    %v870 = vld [vmem:[%s869] sm:$0xff]
    %v871 = vld [vmem:[%s4] sm:$0xff]
    %v872 = vld [vmem:[%s4 + $0x8] sm:$0xff]
    %v873 = vld [vmem:[%s4 + $0x10] sm:$0xff]
    %v874 = vld [vmem:[%s4 + $0x18] sm:$0xff]
    %v876 = vsel %vm189, %v866, 0
    %878 = vmatprep.subr.mxu0 0.0
    %879 = vmatpush1.msra.mxu0 0.0
    %880 = vmatprep.subr.mxu0 0.0
    %881 = vmatpush1.msra.mxu0 0.0
    %882 = vmatprep.subr.mxu0 0.0
    %883 = vmatpush1.msra.mxu0 0.0
    %884 = vmatprep.subr.mxu0 0.0
    %885 = vmatpush1.msra.mxu0 0.0
    %886 = vmatprep.subr.mxu0 0.0
    %887 = vmatpush1.msra.mxu0 0.0
    %888 = vmatprep.subr.mxu0 0.0
    %889 = vmatpush1.msra.mxu0 0.0
    %890 = vmatprep.subr.mxu0 0.0
    %891 = vmatpush1.msra.mxu0 0.0
    %892 = vmatprep.subr.mxu0 0.0
    %893 = vmatpush1.msra.mxu0 0.0
    %894 = vmatprep.subr.mxu0 0.0
    %895 = vmatpush1.msra.mxu0 0.0
    %896 = vmatprep.subr.mxu0 0.0
    %897 = vmatpush1.msra.mxu0 0.0
    %898 = vmatprep.subr.mxu0 0.0
    %899 = vmatpush1.msra.mxu0 0.0
    %900 = vmatprep.subr.mxu0 0.0
    %901 = vmatpush1.msra.mxu0 0.0
    %902 = vmatprep.subr.mxu0 0.0
    %903 = vmatpush1.msra.mxu0 %v874
    %904 = vmatprep.subr.mxu0 0.0
    %905 = vmatpush1.msra.mxu0 %v873
    %906 = vmatprep.subr.mxu0 0.0
    %907 = vmatpush1.msra.mxu0 %v872
    %908 = vmatprep.subr.mxu0 0.0
    %909 = vmatpush1.msra.mxu0 %v871
    %910 = vmatprep.subr.mxu0 0.0
    %911 = vmatpush2.msra.mxu0 0.0
    %912 = vmatprep.subr.mxu0 0.0
    %913 = vmatpush2.msra.mxu0 0.0
    %914 = vmatprep.subr.mxu0 0.0
    %915 = vmatpush2.msra.mxu0 0.0
    %916 = vmatprep.subr.mxu0 0.0
    %917 = vmatpush2.msra.mxu0 0.0
    %918 = vmatprep.subr.mxu0 0.0
    %919 = vmatpush2.msra.mxu0 0.0
    %920 = vmatprep.subr.mxu0 0.0
    %921 = vmatpush2.msra.mxu0 0.0
    %922 = vmatprep.subr.mxu0 0.0
    %923 = vmatpush2.msra.mxu0 0.0
    %924 = vmatprep.subr.mxu0 0.0
    %925 = vmatpush2.msra.mxu0 0.0
    %926 = vmatprep.subr.mxu0 0.0
    %927 = vmatpush2.msra.mxu0 0.0
    %928 = vmatprep.subr.mxu0 0.0
    %929 = vmatpush2.msra.mxu0 0.0
    %930 = vmatprep.subr.mxu0 0.0
    %931 = vmatpush2.msra.mxu0 0.0
    %932 = vmatprep.subr.mxu0 0.0
    %933 = vmatpush2.msra.mxu0 0.0
    %934 = vmatprep.subr.mxu0 0.0
    %935 = vmatpush2.msra.mxu0 0.0
    %936 = vmatprep.subr.mxu0 0.0
    %937 = vmatpush2.msra.mxu0 0.0
    %938 = vmatprep.subr.mxu0 0.0
    %939 = vmatpush2.msra.mxu0 0.0
    %940 = vmatprep.subr.mxu0 0.0
    %941 = vmatpush2.msra.mxu0 0.0
    %942 = vmatprep.mubr.f32.mxu0 0.0
    %943 = vmatmul.mubr.f32.gmra.mxu0 %v876
    %v944 = vpop.f32.mrf.mxu0
    %v945 = vadd.f32 0.0, %v944
    %v946 = vpop.f32.mrf.mxu0
    %947 = vdwg.mxu0
    %v948 = vadd.f32 %v870, %v945
    %v949 = vtanh.pop %v948
    %v950 = vld [vmem:[%s5] sm:$0xff]
    %v951 = vld [vmem:[%s5 + $0x8] sm:$0xff]
    %v952 = vld [vmem:[%s5 + $0x10] sm:$0xff]
    %v953 = vld [vmem:[%s5 + $0x18] sm:$0xff]
    %v954 = vld [vmem:[%s6] sm:$0x1]
    %v956 = vlaneseq
    %v957 = vshrl.u32 %v956, 7
    %v958 = vsub.s32 0, %v957
    %v959 = vrot.slane %v954, %v958
    %v962 = vsel %vm189, %v949, 0
    %964 = vmatprep.subr.mxu0 0.0
    %965 = vmatpush1.msra.mxu0 0.0
    %966 = vmatprep.subr.mxu0 0.0
    %967 = vmatpush1.msra.mxu0 0.0
    %968 = vmatprep.subr.mxu0 0.0
    %969 = vmatpush1.msra.mxu0 0.0
    %970 = vmatprep.subr.mxu0 0.0
    %971 = vmatpush1.msra.mxu0 0.0
    %972 = vmatprep.subr.mxu0 0.0
    %973 = vmatpush1.msra.mxu0 0.0
    %974 = vmatprep.subr.mxu0 0.0
    %975 = vmatpush1.msra.mxu0 0.0
    %976 = vmatprep.subr.mxu0 0.0
    %977 = vmatpush1.msra.mxu0 0.0
    %978 = vmatprep.subr.mxu0 0.0
    %979 = vmatpush1.msra.mxu0 0.0
    %980 = vmatprep.subr.mxu0 0.0
    %981 = vmatpush1.msra.mxu0 0.0
    %982 = vmatprep.subr.mxu0 0.0
    %983 = vmatpush1.msra.mxu0 0.0
    %984 = vmatprep.subr.mxu0 0.0
    %985 = vmatpush1.msra.mxu0 0.0
    %986 = vmatprep.subr.mxu0 0.0
    %987 = vmatpush1.msra.mxu0 0.0
    %988 = vmatprep.subr.mxu0 0.0
    %989 = vmatpush1.msra.mxu0 %v953
    %990 = vmatprep.subr.mxu0 0.0
    %991 = vmatpush1.msra.mxu0 %v952
    %992 = vmatprep.subr.mxu0 0.0
    %993 = vmatpush1.msra.mxu0 %v951
    %994 = vmatprep.subr.mxu0 0.0
    %995 = vmatpush1.msra.mxu0 %v950
    %996 = vmatprep.subr.mxu0 0.0
    %997 = vmatpush2.msra.mxu0 0.0
    %998 = vmatprep.subr.mxu0 0.0
    %999 = vmatpush2.msra.mxu0 0.0
    %1000 = vmatprep.subr.mxu0 0.0
    %1001 = vmatpush2.msra.mxu0 0.0
    %1002 = vmatprep.subr.mxu0 0.0
    %1003 = vmatpush2.msra.mxu0 0.0
    %1004 = vmatprep.subr.mxu0 0.0
    %1005 = vmatpush2.msra.mxu0 0.0
    %1006 = vmatprep.subr.mxu0 0.0
    %1007 = vmatpush2.msra.mxu0 0.0
    %1008 = vmatprep.subr.mxu0 0.0
    %1009 = vmatpush2.msra.mxu0 0.0
    %1010 = vmatprep.subr.mxu0 0.0
    %1011 = vmatpush2.msra.mxu0 0.0
    %1012 = vmatprep.subr.mxu0 0.0
    %1013 = vmatpush2.msra.mxu0 0.0
    %1014 = vmatprep.subr.mxu0 0.0
    %1015 = vmatpush2.msra.mxu0 0.0
    %1016 = vmatprep.subr.mxu0 0.0
    %1017 = vmatpush2.msra.mxu0 0.0
    %1018 = vmatprep.subr.mxu0 0.0
    %1019 = vmatpush2.msra.mxu0 0.0
    %1020 = vmatprep.subr.mxu0 0.0
    %1021 = vmatpush2.msra.mxu0 0.0
    %1022 = vmatprep.subr.mxu0 0.0
    %1023 = vmatpush2.msra.mxu0 0.0
    %1024 = vmatprep.subr.mxu0 0.0
    %1025 = vmatpush2.msra.mxu0 0.0
    %1026 = vmatprep.subr.mxu0 0.0
    %1027 = vmatpush2.msra.mxu0 0.0
    %1028 = vmatprep.mubr.f32.mxu0 0.0
    %1029 = vmatmul.mubr.f32.gmra.mxu0 %v962
    %v1030 = vpop.f32.mrf.mxu0
    %v1031 = vadd.f32 %v959, %v1030
    %v1032 = vpop.f32.mrf.mxu0
    %1033 = vdwg.mxu0
    %v1034 = vtanh.pop %v1031
    %s1035 = scalar_lea.vmem [#allocation5], 32
    %1036 = vst.msk [vmem:[%s1035] sm:$0xff] %vm189, %v1034
    %s1037 = scalar_lea.vmem [#allocation2], 40
    %v1038 = vld [vmem:[%s1037] sm:$0xff]
    %v1039 = vld [vmem:[%s4] sm:$0xff]
    %v1040 = vld [vmem:[%s4 + $0x8] sm:$0xff]
    %v1041 = vld [vmem:[%s4 + $0x10] sm:$0xff]
    %v1042 = vld [vmem:[%s4 + $0x18] sm:$0xff]
    %v1044 = vsel %vm189, %v1034, 0
    %1046 = vmatprep.subr.mxu0 0.0
    %1047 = vmatpush1.msra.mxu0 0.0
    %1048 = vmatprep.subr.mxu0 0.0
    %1049 = vmatpush1.msra.mxu0 0.0
    %1050 = vmatprep.subr.mxu0 0.0
    %1051 = vmatpush1.msra.mxu0 0.0
    %1052 = vmatprep.subr.mxu0 0.0
    %1053 = vmatpush1.msra.mxu0 0.0
    %1054 = vmatprep.subr.mxu0 0.0
    %1055 = vmatpush1.msra.mxu0 0.0
    %1056 = vmatprep.subr.mxu0 0.0
    %1057 = vmatpush1.msra.mxu0 0.0
    %1058 = vmatprep.subr.mxu0 0.0
    %1059 = vmatpush1.msra.mxu0 0.0
    %1060 = vmatprep.subr.mxu0 0.0
    %1061 = vmatpush1.msra.mxu0 0.0
    %1062 = vmatprep.subr.mxu0 0.0
    %1063 = vmatpush1.msra.mxu0 0.0
    %1064 = vmatprep.subr.mxu0 0.0
    %1065 = vmatpush1.msra.mxu0 0.0
    %1066 = vmatprep.subr.mxu0 0.0
    %1067 = vmatpush1.msra.mxu0 0.0
    %1068 = vmatprep.subr.mxu0 0.0
    %1069 = vmatpush1.msra.mxu0 0.0
    %1070 = vmatprep.subr.mxu0 0.0
    %1071 = vmatpush1.msra.mxu0 %v1042
    %1072 = vmatprep.subr.mxu0 0.0
    %1073 = vmatpush1.msra.mxu0 %v1041
    %1074 = vmatprep.subr.mxu0 0.0
    %1075 = vmatpush1.msra.mxu0 %v1040
    %1076 = vmatprep.subr.mxu0 0.0
    %1077 = vmatpush1.msra.mxu0 %v1039
    %1078 = vmatprep.subr.mxu0 0.0
    %1079 = vmatpush2.msra.mxu0 0.0
    %1080 = vmatprep.subr.mxu0 0.0
    %1081 = vmatpush2.msra.mxu0 0.0
    %1082 = vmatprep.subr.mxu0 0.0
    %1083 = vmatpush2.msra.mxu0 0.0
    %1084 = vmatprep.subr.mxu0 0.0
    %1085 = vmatpush2.msra.mxu0 0.0
    %1086 = vmatprep.subr.mxu0 0.0
    %1087 = vmatpush2.msra.mxu0 0.0
    %1088 = vmatprep.subr.mxu0 0.0
    %1089 = vmatpush2.msra.mxu0 0.0
    %1090 = vmatprep.subr.mxu0 0.0
    %1091 = vmatpush2.msra.mxu0 0.0
    %1092 = vmatprep.subr.mxu0 0.0
    %1093 = vmatpush2.msra.mxu0 0.0
    %1094 = vmatprep.subr.mxu0 0.0
    %1095 = vmatpush2.msra.mxu0 0.0
    %1096 = vmatprep.subr.mxu0 0.0
    %1097 = vmatpush2.msra.mxu0 0.0
    %1098 = vmatprep.subr.mxu0 0.0
    %1099 = vmatpush2.msra.mxu0 0.0
    %1100 = vmatprep.subr.mxu0 0.0
    %1101 = vmatpush2.msra.mxu0 0.0
    %1102 = vmatprep.subr.mxu0 0.0
    %1103 = vmatpush2.msra.mxu0 0.0
    %1104 = vmatprep.subr.mxu0 0.0
    %1105 = vmatpush2.msra.mxu0 0.0
    %1106 = vmatprep.subr.mxu0 0.0
    %1107 = vmatpush2.msra.mxu0 0.0
    %1108 = vmatprep.subr.mxu0 0.0
    %1109 = vmatpush2.msra.mxu0 0.0
    %1110 = vmatprep.mubr.f32.mxu0 0.0
    %1111 = vmatmul.mubr.f32.gmra.mxu0 %v1044
    %v1112 = vpop.f32.mrf.mxu0
    %v1113 = vadd.f32 0.0, %v1112
    %v1114 = vpop.f32.mrf.mxu0
    %1115 = vdwg.mxu0
    %v1116 = vadd.f32 %v1038, %v1113
    %v1117 = vtanh.pop %v1116
    %v1118 = vld [vmem:[%s5] sm:$0xff]
    %v1119 = vld [vmem:[%s5 + $0x8] sm:$0xff]
    %v1120 = vld [vmem:[%s5 + $0x10] sm:$0xff]
    %v1121 = vld [vmem:[%s5 + $0x18] sm:$0xff]
    %v1122 = vld [vmem:[%s6] sm:$0x1]
    %v1124 = vlaneseq
    %v1125 = vshrl.u32 %v1124, 7
    %v1126 = vsub.s32 0, %v1125
    %v1127 = vrot.slane %v1122, %v1126
    %v1130 = vsel %vm189, %v1117, 0
    %1132 = vmatprep.subr.mxu0 0.0
    %1133 = vmatpush1.msra.mxu0 0.0
    %1134 = vmatprep.subr.mxu0 0.0
    %1135 = vmatpush1.msra.mxu0 0.0
    %1136 = vmatprep.subr.mxu0 0.0
    %1137 = vmatpush1.msra.mxu0 0.0
    %1138 = vmatprep.subr.mxu0 0.0
    %1139 = vmatpush1.msra.mxu0 0.0
    %1140 = vmatprep.subr.mxu0 0.0
    %1141 = vmatpush1.msra.mxu0 0.0
    %1142 = vmatprep.subr.mxu0 0.0
    %1143 = vmatpush1.msra.mxu0 0.0
    %1144 = vmatprep.subr.mxu0 0.0
    %1145 = vmatpush1.msra.mxu0 0.0
    %1146 = vmatprep.subr.mxu0 0.0
    %1147 = vmatpush1.msra.mxu0 0.0
    %1148 = vmatprep.subr.mxu0 0.0
    %1149 = vmatpush1.msra.mxu0 0.0
    %1150 = vmatprep.subr.mxu0 0.0
    %1151 = vmatpush1.msra.mxu0 0.0
    %1152 = vmatprep.subr.mxu0 0.0
    %1153 = vmatpush1.msra.mxu0 0.0
    %1154 = vmatprep.subr.mxu0 0.0
    %1155 = vmatpush1.msra.mxu0 0.0
    %1156 = vmatprep.subr.mxu0 0.0
    %1157 = vmatpush1.msra.mxu0 %v1121
    %1158 = vmatprep.subr.mxu0 0.0
    %1159 = vmatpush1.msra.mxu0 %v1120
    %1160 = vmatprep.subr.mxu0 0.0
    %1161 = vmatpush1.msra.mxu0 %v1119
    %1162 = vmatprep.subr.mxu0 0.0
    %1163 = vmatpush1.msra.mxu0 %v1118
    %1164 = vmatprep.subr.mxu0 0.0
    %1165 = vmatpush2.msra.mxu0 0.0
    %1166 = vmatprep.subr.mxu0 0.0
    %1167 = vmatpush2.msra.mxu0 0.0
    %1168 = vmatprep.subr.mxu0 0.0
    %1169 = vmatpush2.msra.mxu0 0.0
    %1170 = vmatprep.subr.mxu0 0.0
    %1171 = vmatpush2.msra.mxu0 0.0
    %1172 = vmatprep.subr.mxu0 0.0
    %1173 = vmatpush2.msra.mxu0 0.0
    %1174 = vmatprep.subr.mxu0 0.0
    %1175 = vmatpush2.msra.mxu0 0.0
    %1176 = vmatprep.subr.mxu0 0.0
    %1177 = vmatpush2.msra.mxu0 0.0
    %1178 = vmatprep.subr.mxu0 0.0
    %1179 = vmatpush2.msra.mxu0 0.0
    %1180 = vmatprep.subr.mxu0 0.0
    %1181 = vmatpush2.msra.mxu0 0.0
    %1182 = vmatprep.subr.mxu0 0.0
    %1183 = vmatpush2.msra.mxu0 0.0
    %1184 = vmatprep.subr.mxu0 0.0
    %1185 = vmatpush2.msra.mxu0 0.0
    %1186 = vmatprep.subr.mxu0 0.0
    %1187 = vmatpush2.msra.mxu0 0.0
    %1188 = vmatprep.subr.mxu0 0.0
    %1189 = vmatpush2.msra.mxu0 0.0
    %1190 = vmatprep.subr.mxu0 0.0
    %1191 = vmatpush2.msra.mxu0 0.0
    %1192 = vmatprep.subr.mxu0 0.0
    %1193 = vmatpush2.msra.mxu0 0.0
    %1194 = vmatprep.subr.mxu0 0.0
    %1195 = vmatpush2.msra.mxu0 0.0
    %1196 = vmatprep.mubr.f32.mxu0 0.0
    %1197 = vmatmul.mubr.f32.gmra.mxu0 %v1130
    %v1198 = vpop.f32.mrf.mxu0
    %v1199 = vadd.f32 %v1127, %v1198
    %v1200 = vpop.f32.mrf.mxu0
    %1201 = vdwg.mxu0
    %v1202 = vtanh.pop %v1199
    %s1203 = scalar_lea.vmem [#allocation5], 40
    %1204 = vst.msk [vmem:[%s1203] sm:$0xff] %vm189, %v1202
    %s1205 = scalar_lea.vmem [#allocation2], 48
    %v1206 = vld [vmem:[%s1205] sm:$0xff]
    %v1207 = vld [vmem:[%s4] sm:$0xff]
    %v1208 = vld [vmem:[%s4 + $0x8] sm:$0xff]
    %v1209 = vld [vmem:[%s4 + $0x10] sm:$0xff]
    %v1210 = vld [vmem:[%s4 + $0x18] sm:$0xff]
    %v1212 = vsel %vm189, %v1202, 0
    %1214 = vmatprep.subr.mxu0 0.0
    %1215 = vmatpush1.msra.mxu0 0.0
    %1216 = vmatprep.subr.mxu0 0.0
    %1217 = vmatpush1.msra.mxu0 0.0
    %1218 = vmatprep.subr.mxu0 0.0
    %1219 = vmatpush1.msra.mxu0 0.0
    %1220 = vmatprep.subr.mxu0 0.0
    %1221 = vmatpush1.msra.mxu0 0.0
    %1222 = vmatprep.subr.mxu0 0.0
    %1223 = vmatpush1.msra.mxu0 0.0
    %1224 = vmatprep.subr.mxu0 0.0
    %1225 = vmatpush1.msra.mxu0 0.0
    %1226 = vmatprep.subr.mxu0 0.0
    %1227 = vmatpush1.msra.mxu0 0.0
    %1228 = vmatprep.subr.mxu0 0.0
    %1229 = vmatpush1.msra.mxu0 0.0
    %1230 = vmatprep.subr.mxu0 0.0
    %1231 = vmatpush1.msra.mxu0 0.0
    %1232 = vmatprep.subr.mxu0 0.0
    %1233 = vmatpush1.msra.mxu0 0.0
    %1234 = vmatprep.subr.mxu0 0.0
    %1235 = vmatpush1.msra.mxu0 0.0
    %1236 = vmatprep.subr.mxu0 0.0
    %1237 = vmatpush1.msra.mxu0 0.0
    %1238 = vmatprep.subr.mxu0 0.0
    %1239 = vmatpush1.msra.mxu0 %v1210
    %1240 = vmatprep.subr.mxu0 0.0
    %1241 = vmatpush1.msra.mxu0 %v1209
    %1242 = vmatprep.subr.mxu0 0.0
    %1243 = vmatpush1.msra.mxu0 %v1208
    %1244 = vmatprep.subr.mxu0 0.0
    %1245 = vmatpush1.msra.mxu0 %v1207
    %1246 = vmatprep.subr.mxu0 0.0
    %1247 = vmatpush2.msra.mxu0 0.0
    %1248 = vmatprep.subr.mxu0 0.0
    %1249 = vmatpush2.msra.mxu0 0.0
    %1250 = vmatprep.subr.mxu0 0.0
    %1251 = vmatpush2.msra.mxu0 0.0
    %1252 = vmatprep.subr.mxu0 0.0
    %1253 = vmatpush2.msra.mxu0 0.0
    %1254 = vmatprep.subr.mxu0 0.0
    %1255 = vmatpush2.msra.mxu0 0.0
    %1256 = vmatprep.subr.mxu0 0.0
    %1257 = vmatpush2.msra.mxu0 0.0
    %1258 = vmatprep.subr.mxu0 0.0
    %1259 = vmatpush2.msra.mxu0 0.0
    %1260 = vmatprep.subr.mxu0 0.0
    %1261 = vmatpush2.msra.mxu0 0.0
    %1262 = vmatprep.subr.mxu0 0.0
    %1263 = vmatpush2.msra.mxu0 0.0
    %1264 = vmatprep.subr.mxu0 0.0
    %1265 = vmatpush2.msra.mxu0 0.0
    %1266 = vmatprep.subr.mxu0 0.0
    %1267 = vmatpush2.msra.mxu0 0.0
    %1268 = vmatprep.subr.mxu0 0.0
    %1269 = vmatpush2.msra.mxu0 0.0
    %1270 = vmatprep.subr.mxu0 0.0
    %1271 = vmatpush2.msra.mxu0 0.0
    %1272 = vmatprep.subr.mxu0 0.0
    %1273 = vmatpush2.msra.mxu0 0.0
    %1274 = vmatprep.subr.mxu0 0.0
    %1275 = vmatpush2.msra.mxu0 0.0
    %1276 = vmatprep.subr.mxu0 0.0
    %1277 = vmatpush2.msra.mxu0 0.0
    %1278 = vmatprep.mubr.f32.mxu0 0.0
    %1279 = vmatmul.mubr.f32.gmra.mxu0 %v1212
    %v1280 = vpop.f32.mrf.mxu0
    %v1281 = vadd.f32 0.0, %v1280
    %v1282 = vpop.f32.mrf.mxu0
    %1283 = vdwg.mxu0
    %v1284 = vadd.f32 %v1206, %v1281
    %v1285 = vtanh.pop %v1284
    %v1286 = vld [vmem:[%s5] sm:$0xff]
    %v1287 = vld [vmem:[%s5 + $0x8] sm:$0xff]
    %v1288 = vld [vmem:[%s5 + $0x10] sm:$0xff]
    %v1289 = vld [vmem:[%s5 + $0x18] sm:$0xff]
    %v1290 = vld [vmem:[%s6] sm:$0x1]
    %v1292 = vlaneseq
    %v1293 = vshrl.u32 %v1292, 7
    %v1294 = vsub.s32 0, %v1293
    %v1295 = vrot.slane %v1290, %v1294
    %v1298 = vsel %vm189, %v1285, 0
    %1300 = vmatprep.subr.mxu0 0.0
    %1301 = vmatpush1.msra.mxu0 0.0
    %1302 = vmatprep.subr.mxu0 0.0
    %1303 = vmatpush1.msra.mxu0 0.0
    %1304 = vmatprep.subr.mxu0 0.0
    %1305 = vmatpush1.msra.mxu0 0.0
    %1306 = vmatprep.subr.mxu0 0.0
    %1307 = vmatpush1.msra.mxu0 0.0
    %1308 = vmatprep.subr.mxu0 0.0
    %1309 = vmatpush1.msra.mxu0 0.0
    %1310 = vmatprep.subr.mxu0 0.0
    %1311 = vmatpush1.msra.mxu0 0.0
    %1312 = vmatprep.subr.mxu0 0.0
    %1313 = vmatpush1.msra.mxu0 0.0
    %1314 = vmatprep.subr.mxu0 0.0
    %1315 = vmatpush1.msra.mxu0 0.0
    %1316 = vmatprep.subr.mxu0 0.0
    %1317 = vmatpush1.msra.mxu0 0.0
    %1318 = vmatprep.subr.mxu0 0.0
    %1319 = vmatpush1.msra.mxu0 0.0
    %1320 = vmatprep.subr.mxu0 0.0
    %1321 = vmatpush1.msra.mxu0 0.0
    %1322 = vmatprep.subr.mxu0 0.0
    %1323 = vmatpush1.msra.mxu0 0.0
    %1324 = vmatprep.subr.mxu0 0.0
    %1325 = vmatpush1.msra.mxu0 %v1289
    %1326 = vmatprep.subr.mxu0 0.0
    %1327 = vmatpush1.msra.mxu0 %v1288
    %1328 = vmatprep.subr.mxu0 0.0
    %1329 = vmatpush1.msra.mxu0 %v1287
    %1330 = vmatprep.subr.mxu0 0.0
    %1331 = vmatpush1.msra.mxu0 %v1286
    %1332 = vmatprep.subr.mxu0 0.0
    %1333 = vmatpush2.msra.mxu0 0.0
    %1334 = vmatprep.subr.mxu0 0.0
    %1335 = vmatpush2.msra.mxu0 0.0
    %1336 = vmatprep.subr.mxu0 0.0
    %1337 = vmatpush2.msra.mxu0 0.0
    %1338 = vmatprep.subr.mxu0 0.0
    %1339 = vmatpush2.msra.mxu0 0.0
    %1340 = vmatprep.subr.mxu0 0.0
    %1341 = vmatpush2.msra.mxu0 0.0
    %1342 = vmatprep.subr.mxu0 0.0
    %1343 = vmatpush2.msra.mxu0 0.0
    %1344 = vmatprep.subr.mxu0 0.0
    %1345 = vmatpush2.msra.mxu0 0.0
    %1346 = vmatprep.subr.mxu0 0.0
    %1347 = vmatpush2.msra.mxu0 0.0
    %1348 = vmatprep.subr.mxu0 0.0
    %1349 = vmatpush2.msra.mxu0 0.0
    %1350 = vmatprep.subr.mxu0 0.0
    %1351 = vmatpush2.msra.mxu0 0.0
    %1352 = vmatprep.subr.mxu0 0.0
    %1353 = vmatpush2.msra.mxu0 0.0
    %1354 = vmatprep.subr.mxu0 0.0
    %1355 = vmatpush2.msra.mxu0 0.0
    %1356 = vmatprep.subr.mxu0 0.0
    %1357 = vmatpush2.msra.mxu0 0.0
    %1358 = vmatprep.subr.mxu0 0.0
    %1359 = vmatpush2.msra.mxu0 0.0
    %1360 = vmatprep.subr.mxu0 0.0
    %1361 = vmatpush2.msra.mxu0 0.0
    %1362 = vmatprep.subr.mxu0 0.0
    %1363 = vmatpush2.msra.mxu0 0.0
    %1364 = vmatprep.mubr.f32.mxu0 0.0
    %1365 = vmatmul.mubr.f32.gmra.mxu0 %v1298
    %v1366 = vpop.f32.mrf.mxu0
    %v1367 = vadd.f32 %v1295, %v1366
    %v1368 = vpop.f32.mrf.mxu0
    %1369 = vdwg.mxu0
    %v1370 = vtanh.pop %v1367
    %s1371 = scalar_lea.vmem [#allocation5], 48
    %1372 = vst.msk [vmem:[%s1371] sm:$0xff] %vm189, %v1370
    %s1373 = scalar_lea.vmem [#allocation2], 56
    %v1374 = vld [vmem:[%s1373] sm:$0xff]
    %v1375 = vld [vmem:[%s4] sm:$0xff]
    %v1376 = vld [vmem:[%s4 + $0x8] sm:$0xff]
    %v1377 = vld [vmem:[%s4 + $0x10] sm:$0xff]
    %v1378 = vld [vmem:[%s4 + $0x18] sm:$0xff]
    %v1380 = vsel %vm189, %v1370, 0
    %1382 = vmatprep.subr.mxu0 0.0
    %1383 = vmatpush1.msra.mxu0 0.0
    %1384 = vmatprep.subr.mxu0 0.0
    %1385 = vmatpush1.msra.mxu0 0.0
    %1386 = vmatprep.subr.mxu0 0.0
    %1387 = vmatpush1.msra.mxu0 0.0
    %1388 = vmatprep.subr.mxu0 0.0
    %1389 = vmatpush1.msra.mxu0 0.0
    %1390 = vmatprep.subr.mxu0 0.0
    %1391 = vmatpush1.msra.mxu0 0.0
    %1392 = vmatprep.subr.mxu0 0.0
    %1393 = vmatpush1.msra.mxu0 0.0
    %1394 = vmatprep.subr.mxu0 0.0
    %1395 = vmatpush1.msra.mxu0 0.0
    %1396 = vmatprep.subr.mxu0 0.0
    %1397 = vmatpush1.msra.mxu0 0.0
    %1398 = vmatprep.subr.mxu0 0.0
    %1399 = vmatpush1.msra.mxu0 0.0
    %1400 = vmatprep.subr.mxu0 0.0
    %1401 = vmatpush1.msra.mxu0 0.0
    %1402 = vmatprep.subr.mxu0 0.0
    %1403 = vmatpush1.msra.mxu0 0.0
    %1404 = vmatprep.subr.mxu0 0.0
    %1405 = vmatpush1.msra.mxu0 0.0
    %1406 = vmatprep.subr.mxu0 0.0
    %1407 = vmatpush1.msra.mxu0 %v1378
    %1408 = vmatprep.subr.mxu0 0.0
    %1409 = vmatpush1.msra.mxu0 %v1377
    %1410 = vmatprep.subr.mxu0 0.0
    %1411 = vmatpush1.msra.mxu0 %v1376
    %1412 = vmatprep.subr.mxu0 0.0
    %1413 = vmatpush1.msra.mxu0 %v1375
    %1414 = vmatprep.subr.mxu0 0.0
    %1415 = vmatpush2.msra.mxu0 0.0
    %1416 = vmatprep.subr.mxu0 0.0
    %1417 = vmatpush2.msra.mxu0 0.0
    %1418 = vmatprep.subr.mxu0 0.0
    %1419 = vmatpush2.msra.mxu0 0.0
    %1420 = vmatprep.subr.mxu0 0.0
    %1421 = vmatpush2.msra.mxu0 0.0
    %1422 = vmatprep.subr.mxu0 0.0
    %1423 = vmatpush2.msra.mxu0 0.0
    %1424 = vmatprep.subr.mxu0 0.0
    %1425 = vmatpush2.msra.mxu0 0.0
    %1426 = vmatprep.subr.mxu0 0.0
    %1427 = vmatpush2.msra.mxu0 0.0
    %1428 = vmatprep.subr.mxu0 0.0
    %1429 = vmatpush2.msra.mxu0 0.0
    %1430 = vmatprep.subr.mxu0 0.0
    %1431 = vmatpush2.msra.mxu0 0.0
    %1432 = vmatprep.subr.mxu0 0.0
    %1433 = vmatpush2.msra.mxu0 0.0
    %1434 = vmatprep.subr.mxu0 0.0
    %1435 = vmatpush2.msra.mxu0 0.0
    %1436 = vmatprep.subr.mxu0 0.0
    %1437 = vmatpush2.msra.mxu0 0.0
    %1438 = vmatprep.subr.mxu0 0.0
    %1439 = vmatpush2.msra.mxu0 0.0
    %1440 = vmatprep.subr.mxu0 0.0
    %1441 = vmatpush2.msra.mxu0 0.0
    %1442 = vmatprep.subr.mxu0 0.0
    %1443 = vmatpush2.msra.mxu0 0.0
    %1444 = vmatprep.subr.mxu0 0.0
    %1445 = vmatpush2.msra.mxu0 0.0
    %1446 = vmatprep.mubr.f32.mxu0 0.0
    %1447 = vmatmul.mubr.f32.gmra.mxu0 %v1380
    %v1448 = vpop.f32.mrf.mxu0
    %v1449 = vadd.f32 0.0, %v1448
    %v1450 = vpop.f32.mrf.mxu0
    %1451 = vdwg.mxu0
    %v1452 = vadd.f32 %v1374, %v1449
    %v1453 = vtanh.pop %v1452
    %v1454 = vld [vmem:[%s5] sm:$0xff]
    %v1455 = vld [vmem:[%s5 + $0x8] sm:$0xff]
    %v1456 = vld [vmem:[%s5 + $0x10] sm:$0xff]
    %v1457 = vld [vmem:[%s5 + $0x18] sm:$0xff]
    %v1458 = vld [vmem:[%s6] sm:$0x1]
    %v1460 = vlaneseq
    %v1461 = vshrl.u32 %v1460, 7
    %v1462 = vsub.s32 0, %v1461
    %v1463 = vrot.slane %v1458, %v1462
    %v1466 = vsel %vm189, %v1453, 0
    %1468 = vmatprep.subr.mxu0 0.0
    %1469 = vmatpush1.msra.mxu0 0.0
    %1470 = vmatprep.subr.mxu0 0.0
    %1471 = vmatpush1.msra.mxu0 0.0
    %1472 = vmatprep.subr.mxu0 0.0
    %1473 = vmatpush1.msra.mxu0 0.0
    %1474 = vmatprep.subr.mxu0 0.0
    %1475 = vmatpush1.msra.mxu0 0.0
    %1476 = vmatprep.subr.mxu0 0.0
    %1477 = vmatpush1.msra.mxu0 0.0
    %1478 = vmatprep.subr.mxu0 0.0
    %1479 = vmatpush1.msra.mxu0 0.0
    %1480 = vmatprep.subr.mxu0 0.0
    %1481 = vmatpush1.msra.mxu0 0.0
    %1482 = vmatprep.subr.mxu0 0.0
    %1483 = vmatpush1.msra.mxu0 0.0
    %1484 = vmatprep.subr.mxu0 0.0
    %1485 = vmatpush1.msra.mxu0 0.0
    %1486 = vmatprep.subr.mxu0 0.0
    %1487 = vmatpush1.msra.mxu0 0.0
    %1488 = vmatprep.subr.mxu0 0.0
    %1489 = vmatpush1.msra.mxu0 0.0
    %1490 = vmatprep.subr.mxu0 0.0
    %1491 = vmatpush1.msra.mxu0 0.0
    %1492 = vmatprep.subr.mxu0 0.0
    %1493 = vmatpush1.msra.mxu0 %v1457
    %1494 = vmatprep.subr.mxu0 0.0
    %1495 = vmatpush1.msra.mxu0 %v1456
    %1496 = vmatprep.subr.mxu0 0.0
    %1497 = vmatpush1.msra.mxu0 %v1455
    %1498 = vmatprep.subr.mxu0 0.0
    %1499 = vmatpush1.msra.mxu0 %v1454
    %1500 = vmatprep.subr.mxu0 0.0
    %1501 = vmatpush2.msra.mxu0 0.0
    %1502 = vmatprep.subr.mxu0 0.0
    %1503 = vmatpush2.msra.mxu0 0.0
    %1504 = vmatprep.subr.mxu0 0.0
    %1505 = vmatpush2.msra.mxu0 0.0
    %1506 = vmatprep.subr.mxu0 0.0
    %1507 = vmatpush2.msra.mxu0 0.0
    %1508 = vmatprep.subr.mxu0 0.0
    %1509 = vmatpush2.msra.mxu0 0.0
    %1510 = vmatprep.subr.mxu0 0.0
    %1511 = vmatpush2.msra.mxu0 0.0
    %1512 = vmatprep.subr.mxu0 0.0
    %1513 = vmatpush2.msra.mxu0 0.0
    %1514 = vmatprep.subr.mxu0 0.0
    %1515 = vmatpush2.msra.mxu0 0.0
    %1516 = vmatprep.subr.mxu0 0.0
    %1517 = vmatpush2.msra.mxu0 0.0
    %1518 = vmatprep.subr.mxu0 0.0
    %1519 = vmatpush2.msra.mxu0 0.0
    %1520 = vmatprep.subr.mxu0 0.0
    %1521 = vmatpush2.msra.mxu0 0.0
    %1522 = vmatprep.subr.mxu0 0.0
    %1523 = vmatpush2.msra.mxu0 0.0
    %1524 = vmatprep.subr.mxu0 0.0
    %1525 = vmatpush2.msra.mxu0 0.0
    %1526 = vmatprep.subr.mxu0 0.0
    %1527 = vmatpush2.msra.mxu0 0.0
    %1528 = vmatprep.subr.mxu0 0.0
    %1529 = vmatpush2.msra.mxu0 0.0
    %1530 = vmatprep.subr.mxu0 0.0
    %1531 = vmatpush2.msra.mxu0 0.0
    %1532 = vmatprep.mubr.f32.mxu0 0.0
    %1533 = vmatmul.mubr.f32.gmra.mxu0 %v1466
    %v1534 = vpop.f32.mrf.mxu0
    %v1535 = vadd.f32 %v1463, %v1534
    %v1536 = vpop.f32.mrf.mxu0
    %1537 = vdwg.mxu0
    %v1538 = vtanh.pop %v1535
    %s1539 = scalar_lea.vmem [#allocation5], 56
    %1540 = vst.msk [vmem:[%s1539] sm:$0xff] %vm189, %v1538
    %v1541 = vld [vmem:[#allocation5] sm:$0xff]
    %v1542 = vld [vmem:[#allocation5 + $0x8] sm:$0xff]
    %v1543 = vld [vmem:[#allocation5 + $0x10] sm:$0xff]
    %v1544 = vld [vmem:[#allocation5 + $0x18] sm:$0xff]
    %v1545 = vld [vmem:[#allocation5 + $0x20] sm:$0xff]
    %v1546 = vld [vmem:[#allocation5 + $0x28] sm:$0xff]
    %v1547 = vld [vmem:[#allocation5 + $0x30] sm:$0xff]
    %v1548 = vld [vmem:[#allocation5 + $0x38] sm:$0xff]
    %v1549 = vld [vmem:[%s7] sm:$0xff]
    %v1550 = vld [vmem:[%s7 + $0x8] sm:$0xff]
    %v1551 = vld [vmem:[%s7 + $0x10] sm:$0xff]
    %v1552 = vld [vmem:[%s7 + $0x18] sm:$0xff]
    %v1553 = vld [vmem:[%s8] sm:$0x1]
    %v1555 = vlaneseq
    %v1556 = vshrl.u32 %v1555, 7
    %v1557 = vsub.s32 0, %v1556
    %v1558 = vrot.slane %v1553, %v1557
    %v1561 = vsel %vm189, %v1541, 0
    %v1564 = vsel %vm189, %v1542, 0
    %v1567 = vsel %vm189, %v1543, 0
    %v1570 = vsel %vm189, %v1544, 0
    %v1573 = vsel %vm189, %v1545, 0
    %v1576 = vsel %vm189, %v1546, 0
    %v1579 = vsel %vm189, %v1547, 0
    %v1582 = vsel %vm189, %v1548, 0
    %1584 = vmatprep.subr.mxu0 0.0
    %1585 = vmatpush1.msra.mxu0 0.0
    %1586 = vmatprep.subr.mxu0 0.0
    %1587 = vmatpush1.msra.mxu0 0.0
    %1588 = vmatprep.subr.mxu0 0.0
    %1589 = vmatpush1.msra.mxu0 0.0
    %1590 = vmatprep.subr.mxu0 0.0
    %1591 = vmatpush1.msra.mxu0 0.0
    %1592 = vmatprep.subr.mxu0 0.0
    %1593 = vmatpush1.msra.mxu0 0.0
    %1594 = vmatprep.subr.mxu0 0.0
    %1595 = vmatpush1.msra.mxu0 0.0
    %1596 = vmatprep.subr.mxu0 0.0
    %1597 = vmatpush1.msra.mxu0 0.0
    %1598 = vmatprep.subr.mxu0 0.0
    %1599 = vmatpush1.msra.mxu0 0.0
    %1600 = vmatprep.subr.mxu0 0.0
    %1601 = vmatpush1.msra.mxu0 0.0
    %1602 = vmatprep.subr.mxu0 0.0
    %1603 = vmatpush1.msra.mxu0 0.0
    %1604 = vmatprep.subr.mxu0 0.0
    %1605 = vmatpush1.msra.mxu0 0.0
    %1606 = vmatprep.subr.mxu0 0.0
    %1607 = vmatpush1.msra.mxu0 0.0
    %1608 = vmatprep.subr.mxu0 0.0
    %1609 = vmatpush1.msra.mxu0 %v1552
    %1610 = vmatprep.subr.mxu0 0.0
    %1611 = vmatpush1.msra.mxu0 %v1551
    %1612 = vmatprep.subr.mxu0 0.0
    %1613 = vmatpush1.msra.mxu0 %v1550
    %1614 = vmatprep.subr.mxu0 0.0
    %1615 = vmatpush1.msra.mxu0 %v1549
    %1616 = vmatprep.subr.mxu0 0.0
    %1617 = vmatpush2.msra.mxu0 0.0
    %1618 = vmatprep.subr.mxu0 0.0
    %1619 = vmatpush2.msra.mxu0 0.0
    %1620 = vmatprep.subr.mxu0 0.0
    %1621 = vmatpush2.msra.mxu0 0.0
    %1622 = vmatprep.subr.mxu0 0.0
    %1623 = vmatpush2.msra.mxu0 0.0
    %1624 = vmatprep.subr.mxu0 0.0
    %1625 = vmatpush2.msra.mxu0 0.0
    %1626 = vmatprep.subr.mxu0 0.0
    %1627 = vmatpush2.msra.mxu0 0.0
    %1628 = vmatprep.subr.mxu0 0.0
    %1629 = vmatpush2.msra.mxu0 0.0
    %1630 = vmatprep.subr.mxu0 0.0
    %1631 = vmatpush2.msra.mxu0 0.0
    %1632 = vmatprep.subr.mxu0 0.0
    %1633 = vmatpush2.msra.mxu0 0.0
    %1634 = vmatprep.subr.mxu0 0.0
    %1635 = vmatpush2.msra.mxu0 0.0
    %1636 = vmatprep.subr.mxu0 0.0
    %1637 = vmatpush2.msra.mxu0 0.0
    %1638 = vmatprep.subr.mxu0 0.0
    %1639 = vmatpush2.msra.mxu0 0.0
    %1640 = vmatprep.subr.mxu0 0.0
    %1641 = vmatpush2.msra.mxu0 0.0
    %1642 = vmatprep.subr.mxu0 0.0
    %1643 = vmatpush2.msra.mxu0 0.0
    %1644 = vmatprep.subr.mxu0 0.0
    %1645 = vmatpush2.msra.mxu0 0.0
    %1646 = vmatprep.subr.mxu0 0.0
    %1647 = vmatpush2.msra.mxu0 0.0
    %1648 = vmatprep.mubr.f32.mxu0 0.0
    %1649 = vmatmul.mubr.f32.gmra.mxu0 %v1561
    %v1650 = vpop.f32.mrf.mxu0
    %v1651 = vadd.f32 %v1558, %v1650
    %v1652 = vpop.f32.mrf.mxu0
    %1653 = vmatprep.mubr.f32.mxu0 0.0
    %1654 = vmatmul.mubr.f32.gmra.mxu0 %v1564
    %v1655 = vpop.f32.mrf.mxu0
    %v1656 = vadd.f32 %v1558, %v1655
    %v1657 = vpop.f32.mrf.mxu0
    %1658 = vmatprep.mubr.f32.mxu0 0.0
    %1659 = vmatmul.mubr.f32.gmra.mxu0 %v1567
    %v1660 = vpop.f32.mrf.mxu0
    %v1661 = vadd.f32 %v1558, %v1660
    %v1662 = vpop.f32.mrf.mxu0
    %1663 = vmatprep.mubr.f32.mxu0 0.0
    %1664 = vmatmul.mubr.f32.gmra.mxu0 %v1570
    %v1665 = vpop.f32.mrf.mxu0
    %v1666 = vadd.f32 %v1558, %v1665
    %v1667 = vpop.f32.mrf.mxu0
    %1668 = vmatprep.mubr.f32.mxu0 0.0
    %1669 = vmatmul.mubr.f32.gmra.mxu0 %v1573
    %v1670 = vpop.f32.mrf.mxu0
    %v1671 = vadd.f32 %v1558, %v1670
    %v1672 = vpop.f32.mrf.mxu0
    %1673 = vmatprep.mubr.f32.mxu0 0.0
    %1674 = vmatmul.mubr.f32.gmra.mxu0 %v1576
    %v1675 = vpop.f32.mrf.mxu0
    %v1676 = vadd.f32 %v1558, %v1675
    %v1677 = vpop.f32.mrf.mxu0
    %1678 = vmatprep.mubr.f32.mxu0 0.0
    %1679 = vmatmul.mubr.f32.gmra.mxu0 %v1579
    %v1680 = vpop.f32.mrf.mxu0
    %v1681 = vadd.f32 %v1558, %v1680
    %v1682 = vpop.f32.mrf.mxu0
    %1683 = vmatprep.mubr.f32.mxu0 0.0
    %1684 = vmatmul.mubr.f32.gmra.mxu0 %v1582
    %v1685 = vpop.f32.mrf.mxu0
    %v1686 = vadd.f32 %v1558, %v1685
    %v1687 = vpop.f32.mrf.mxu0
    %1688 = vdwg.mxu0
    %v1689 = vmax.f32 %v1651, 0.0
    %v1690 = vmax.f32 %v1656, 0.0
    %v1691 = vmax.f32 %v1661, 0.0
    %v1692 = vmax.f32 %v1666, 0.0
    %v1693 = vmax.f32 %v1671, 0.0
    %v1694 = vmax.f32 %v1676, 0.0
    %v1695 = vmax.f32 %v1681, 0.0
    %v1696 = vmax.f32 %v1686, 0.0
    %v1697 = vld [vmem:[%s9] sm:$0xff]
    %v1698 = vld [vmem:[%s9 + $0x8] sm:$0xff]
    %v1699 = vld [vmem:[%s9 + $0x10] sm:$0xff]
    %v1700 = vld [vmem:[%s9 + $0x18] sm:$0xff]
    %v1701 = vld [vmem:[%s10] sm:$0x1]
    %v1703 = vlaneseq
    %v1704 = vshrl.u32 %v1703, 7
    %v1705 = vsub.s32 0, %v1704
    %v1706 = vrot.slane %v1701, %v1705
    %v1709 = vsel %vm189, %v1689, 0
    %v1712 = vsel %vm189, %v1690, 0
    %v1715 = vsel %vm189, %v1691, 0
    %v1718 = vsel %vm189, %v1692, 0
    %v1721 = vsel %vm189, %v1693, 0
    %v1724 = vsel %vm189, %v1694, 0
    %v1727 = vsel %vm189, %v1695, 0
    %v1730 = vsel %vm189, %v1696, 0
    %1732 = vmatprep.subr.mxu0 0.0
    %1733 = vmatpush1.msra.mxu0 0.0
    %1734 = vmatprep.subr.mxu0 0.0
    %1735 = vmatpush1.msra.mxu0 0.0
    %1736 = vmatprep.subr.mxu0 0.0
    %1737 = vmatpush1.msra.mxu0 0.0
    %1738 = vmatprep.subr.mxu0 0.0
    %1739 = vmatpush1.msra.mxu0 0.0
    %1740 = vmatprep.subr.mxu0 0.0
    %1741 = vmatpush1.msra.mxu0 0.0
    %1742 = vmatprep.subr.mxu0 0.0
    %1743 = vmatpush1.msra.mxu0 0.0
    %1744 = vmatprep.subr.mxu0 0.0
    %1745 = vmatpush1.msra.mxu0 0.0
    %1746 = vmatprep.subr.mxu0 0.0
    %1747 = vmatpush1.msra.mxu0 0.0
    %1748 = vmatprep.subr.mxu0 0.0
    %1749 = vmatpush1.msra.mxu0 0.0
    %1750 = vmatprep.subr.mxu0 0.0
    %1751 = vmatpush1.msra.mxu0 0.0
    %1752 = vmatprep.subr.mxu0 0.0
    %1753 = vmatpush1.msra.mxu0 0.0
    %1754 = vmatprep.subr.mxu0 0.0
    %1755 = vmatpush1.msra.mxu0 0.0
    %1756 = vmatprep.subr.mxu0 0.0
    %1757 = vmatpush1.msra.mxu0 %v1700
    %1758 = vmatprep.subr.mxu0 0.0
    %1759 = vmatpush1.msra.mxu0 %v1699
    %1760 = vmatprep.subr.mxu0 0.0
    %1761 = vmatpush1.msra.mxu0 %v1698
    %1762 = vmatprep.subr.mxu0 0.0
    %1763 = vmatpush1.msra.mxu0 %v1697
    %1764 = vmatprep.subr.mxu0 0.0
    %1765 = vmatpush2.msra.mxu0 0.0
    %1766 = vmatprep.subr.mxu0 0.0
    %1767 = vmatpush2.msra.mxu0 0.0
    %1768 = vmatprep.subr.mxu0 0.0
    %1769 = vmatpush2.msra.mxu0 0.0
    %1770 = vmatprep.subr.mxu0 0.0
    %1771 = vmatpush2.msra.mxu0 0.0
    %1772 = vmatprep.subr.mxu0 0.0
    %1773 = vmatpush2.msra.mxu0 0.0
    %1774 = vmatprep.subr.mxu0 0.0
    %1775 = vmatpush2.msra.mxu0 0.0
    %1776 = vmatprep.subr.mxu0 0.0
    %1777 = vmatpush2.msra.mxu0 0.0
    %1778 = vmatprep.subr.mxu0 0.0
    %1779 = vmatpush2.msra.mxu0 0.0
    %1780 = vmatprep.subr.mxu0 0.0
    %1781 = vmatpush2.msra.mxu0 0.0
    %1782 = vmatprep.subr.mxu0 0.0
    %1783 = vmatpush2.msra.mxu0 0.0
    %1784 = vmatprep.subr.mxu0 0.0
    %1785 = vmatpush2.msra.mxu0 0.0
    %1786 = vmatprep.subr.mxu0 0.0
    %1787 = vmatpush2.msra.mxu0 0.0
    %1788 = vmatprep.subr.mxu0 0.0
    %1789 = vmatpush2.msra.mxu0 0.0
    %1790 = vmatprep.subr.mxu0 0.0
    %1791 = vmatpush2.msra.mxu0 0.0
    %1792 = vmatprep.subr.mxu0 0.0
    %1793 = vmatpush2.msra.mxu0 0.0
    %1794 = vmatprep.subr.mxu0 0.0
    %1795 = vmatpush2.msra.mxu0 0.0
    %1796 = vmatprep.mubr.f32.mxu0 0.0
    %1797 = vmatmul.mubr.f32.gmra.mxu0 %v1709
    %v1798 = vpop.f32.mrf.mxu0
    %v1799 = vadd.f32 %v1706, %v1798
    %v1800 = vpop.f32.mrf.mxu0
    %1801 = vmatprep.mubr.f32.mxu0 0.0
    %1802 = vmatmul.mubr.f32.gmra.mxu0 %v1712
    %v1803 = vpop.f32.mrf.mxu0
    %v1804 = vadd.f32 %v1706, %v1803
    %v1805 = vpop.f32.mrf.mxu0
    %1806 = vmatprep.mubr.f32.mxu0 0.0
    %1807 = vmatmul.mubr.f32.gmra.mxu0 %v1715
    %v1808 = vpop.f32.mrf.mxu0
    %v1809 = vadd.f32 %v1706, %v1808
    %v1810 = vpop.f32.mrf.mxu0
    %1811 = vmatprep.mubr.f32.mxu0 0.0
    %1812 = vmatmul.mubr.f32.gmra.mxu0 %v1718
    %v1813 = vpop.f32.mrf.mxu0
    %v1814 = vadd.f32 %v1706, %v1813
    %v1815 = vpop.f32.mrf.mxu0
    %1816 = vmatprep.mubr.f32.mxu0 0.0
    %1817 = vmatmul.mubr.f32.gmra.mxu0 %v1721
    %v1818 = vpop.f32.mrf.mxu0
    %v1819 = vadd.f32 %v1706, %v1818
    %v1820 = vpop.f32.mrf.mxu0
    %1821 = vmatprep.mubr.f32.mxu0 0.0
    %1822 = vmatmul.mubr.f32.gmra.mxu0 %v1724
    %v1823 = vpop.f32.mrf.mxu0
    %v1824 = vadd.f32 %v1706, %v1823
    %v1825 = vpop.f32.mrf.mxu0
    %1826 = vmatprep.mubr.f32.mxu0 0.0
    %1827 = vmatmul.mubr.f32.gmra.mxu0 %v1727
    %v1828 = vpop.f32.mrf.mxu0
    %v1829 = vadd.f32 %v1706, %v1828
    %v1830 = vpop.f32.mrf.mxu0
    %1831 = vmatprep.mubr.f32.mxu0 0.0
    %1832 = vmatmul.mubr.f32.gmra.mxu0 %v1730
    %v1833 = vpop.f32.mrf.mxu0
    %v1834 = vadd.f32 %v1706, %v1833
    %v1835 = vpop.f32.mrf.mxu0
    %1836 = vdwg.mxu0
    %1837 = vst.msk [vmem:[#allocation3] sm:$0xff] %vm59, %v1799
    %1838 = vst.msk [vmem:[#allocation3 + $0x8] sm:$0xff] %vm59, %v1804
    %1839 = vst.msk [vmem:[#allocation3 + $0x10] sm:$0xff] %vm59, %v1809
    %1840 = vst.msk [vmem:[#allocation3 + $0x18] sm:$0xff] %vm59, %v1814
    %1841 = vst.msk [vmem:[#allocation3 + $0x20] sm:$0xff] %vm59, %v1819
    %1842 = vst.msk [vmem:[#allocation3 + $0x28] sm:$0xff] %vm59, %v1824
    %1843 = vst.msk [vmem:[#allocation3 + $0x30] sm:$0xff] %vm59, %v1829
    %1844 = vst.msk [vmem:[#allocation3 + $0x38] sm:$0xff] %vm59, %v1834
    // Predicated region
    $region46: #{rnn_forward_seq.1} parent=1 // pred_check
      _
    $region47: #{rnn_forward_seq.1} parent=1 // pred_check_branch
      %1846 = sbr.rel (0) target = $region49
    $region48: #{rnn_forward_seq.1} parent=1 // pred_region
      %s1848 = ssub.s32 1024, 1024
      %1849 = vsyncadd [#allocation4], %s1848
      %s1850 = sshll.u32 [#allocation3], 4
      %s1851 = int_to_ptr.vmem [resolvable:$true] %s1850
      %1856 = dma.vmem_to_hbm [thread:$0]  %s1851, 1024, %s11, [#allocation4], 128, 128, 8
    $region49: #{rnn_forward_seq.1} parent=1 // pred_fallthru
      _
    // Predicated region
    $region50: #{rnn_forward_seq.1} parent=1 // pred_check
      _
    $region51: #{rnn_forward_seq.1} parent=1 // pred_check_branch
      %1858 = sbr.rel (0) target = $region53
    $region52: #{rnn_forward_seq.1} parent=1 // pred_region
      %s1860 = ssub.s32 1024, 1024
      %1861 = vsyncadd [#allocation6], %s1860
      %s1862 = sshll.u32 [#allocation5], 4
      %s1863 = int_to_ptr.vmem [resolvable:$true] %s1862
      %1868 = dma.vmem_to_hbm [thread:$0]  %s1863, 1024, %s12, [#allocation6], 128, 128, 8
    $region53: #{rnn_forward_seq.1} parent=1 // pred_fallthru
      _
    // Predicated region
    $region54: #{rnn_forward_seq.1} parent=1 // pred_check
      _
    $region55: #{rnn_forward_seq.1} parent=1 // pred_check_branch
      %1870 = sbr.rel (0) target = $region57
    $region56: #{rnn_forward_seq.1} parent=1 // pred_region
      %1871 = dma.done [#allocation4], 1024
    $region57: #{rnn_forward_seq.1} parent=1 // pred_fallthru
      _
    // Predicated region
    $region58: #{rnn_forward_seq.1} parent=1 // pred_check
      _
    $region59: #{rnn_forward_seq.1} parent=1 // pred_check_branch
      %1873 = sbr.rel (0) target = $region61
    $region60: #{rnn_forward_seq.1} parent=1 // pred_region
      %1874 = dma.done [#allocation6], 1024
    $region61: #{rnn_forward_seq.1} parent=1 // pred_fallthru
      _
    %1875 = vsyncpa [#allocation4], 1
    %1876 = vsyncpa [#allocation6], 1

</llo_original>
